<compile_context>
chip_gen: v6e
topology: v6e:2x2x1
jax: 0.10.0
libtpu: 0.0.40
codegen_flags: <defaults>
</compile_context>

<pallas_src>
import math
import functools

import jax
import jax.numpy as jnp
from jax import lax
from jax.experimental import pallas as pl
from jax.experimental.pallas import tpu as pltpu


def pack_qkv_weights(wq, wk, wv, num_heads, dtype=jnp.bfloat16):
    """Pack [Wq * 1/sqrt(dk) | Wk | Wv] once (hoisted) and pre-cast.

    wq, wk : (dim_in, dim_k)  (already transposed from torch's (out, in))
    wv     : (dim_in, dim_v)
    """
    dim_k = wq.shape[1]
    dk = dim_k // num_heads
    norm_fact = 1.0 / math.sqrt(dk)
    w = jnp.concatenate([wq * norm_fact, wk, wv], axis=1)
    return w.astype(dtype)


def _make_mhsa_kernel(n, dim_in, dim_k, dim_v, num_heads, tq, q_seq,
                      compute_dtype, use_scratch, recip_approx):
    nh = num_heads
    dk = dim_k // nh
    dv = dim_v // nh

    def attend(q, k_of, v_of, o_ref):
        # q: (tq, dim_k) compute_dtype, 1/sqrt(dk) already folded into Wq.
        # k_of(h) -> (n, dk), v_of(h) -> (n, dv) in compute_dtype.
        outs = []
        for h in range(nh):                       # static unroll, nh is small
            qh = q[:, h * dk:(h + 1) * dk]
            kh = k_of(h)
            vh = v_of(h)
            # q @ k^T without materializing a transposed copy of k.
            s = lax.dot_general(qh, kh, (((1,), (1,)), ((), ())),
                                preferred_element_type=jnp.float32)  # (tq, n)
            # Numerically stable softmax; elementwise math stays f32
            # (v5e has no bf16 VPU/EUP).
            s = s - jnp.max(s, axis=-1, keepdims=True)
            p = jnp.exp(s)
            denom = jnp.sum(p, axis=-1, keepdims=True)               # (tq, 1)
            att = jnp.dot(p.astype(compute_dtype), vh,
                          preferred_element_type=jnp.float32)        # (tq, dv)
            # Fold the normalizer into the small (tq, dv) result, not (tq, n).
            att = att * pl.reciprocal(denom, approx=recip_approx)
            if dv % 128 == 0:
                # Lane-aligned: store each head directly (no concat copy, no
                # nh live intermediates).
                o_ref[0, :, h * dv:(h + 1) * dv] = att.astype(o_ref.dtype)
            else:
                outs.append(att)
        if dv % 128 != 0:
            # Keep one lane-dense store when the per-head width is sub-lane.
            o_ref[0] = jnp.concatenate(outs, axis=-1).astype(o_ref.dtype)

    def kernel(x_ref, w_ref, o_ref, *scratch):
        # x_ref : (1, n, dim_in)             current batch, compute_dtype
        # w_ref : (dim_in, 2*dim_k + dim_v)  packed [Wq*norm | Wk | Wv]
        # o_ref : (1, tq, dim_v)             final layout, lane-dense
        tile = pl.program_id(1) * q_seq + pl.program_id(2)
        row0 = pl.multiple_of(tile * tq, tq)

        if use_scratch:
            kv_ref = scratch[0]

            # K/V projection once per (batch, parallel-q-chunk); reused by
            # every q tile in the sequential axis.
            @pl.when(pl.program_id(2) == 0)
            def _():
                kv = jnp.dot(x_ref[0], w_ref[:, dim_k:],
                             preferred_element_type=jnp.float32)
                kv_ref[...] = kv.astype(kv_ref.dtype)

            xq = x_ref[0, pl.ds(row0, tq), :]
            q = jnp.dot(xq, w_ref[:, :dim_k],
                        preferred_element_type=jnp.float32
                        ).astype(compute_dtype)
            attend(q,
                   lambda h: kv_ref[:, h * dk:(h + 1) * dk],
                   lambda h: kv_ref[:, dim_k + h * dv:dim_k + (h + 1) * dv],
                   o_ref)
        else:
            if tq == n:
                # Single fused, wide, lane-dense QKV projection.
                proj = jnp.dot(x_ref[0], w_ref[...],
                               preferred_element_type=jnp.float32
                               ).astype(compute_dtype)
                q = proj[:, :dim_k]
                kv = proj[:, dim_k:]
            else:
                xq = x_ref[0, pl.ds(row0, tq), :]
                q = jnp.dot(xq, w_ref[:, :dim_k],
                            preferred_element_type=jnp.float32
                            ).astype(compute_dtype)
                kv = jnp.dot(x_ref[0], w_ref[:, dim_k:],
                             preferred_element_type=jnp.float32
                             ).astype(compute_dtype)
            attend(q,
                   lambda h: kv[:, h * dk:(h + 1) * dk],
                   lambda h: kv[:, dim_k + h * dv:dim_k + (h + 1) * dv],
                   o_ref)

    return kernel


def _vmem_limit_bytes():
    # ~3/4 of per-core VMEM: ~48 MiB on v7x (64 MiB), ~96 MiB on v5e/v6e
    # (128 MiB).  Conservative fallback if the query is unavailable.
    try:
        cap = pltpu.get_tpu_info().vmem_capacity_bytes
        return int(min((cap * 3) // 4, 100 * 1024 * 1024))
    except Exception:
        return 48 * 1024 * 1024


def _pick_q_tile(n, q_tile):
    if n <= q_tile:
        return n
    # Largest divisor of n that is a multiple of 8 (sublane) and <= q_tile.
    for t in range(q_tile, 7, -1):
        if n % t == 0 and t % 8 == 0:
            return t
    # TODO(synk): pad/mask a ragged last q tile instead of whole-sequence
    #             fallback (VMEM risk for very long ragged n, esp. v7x).
    return n


@functools.partial(jax.jit,
                   static_argnames=("dim_k", "dim_v", "num_heads",
                                    "compute_dtype", "q_tile"))
def multi_head_self_attention(x, w_qkv, *, dim_k, dim_v, num_heads,
                              compute_dtype=jnp.bfloat16, q_tile=256):
    """
    x      : (batch, n, dim_in)
    w_qkv  : (dim_in, 2*dim_k + dim_v) from pack_qkv_weights (1/sqrt(dk)
             pre-folded into the Wq columns).
    returns: (batch, n, dim_v) in x.dtype -- same layout as the torch module.
    """
    batch, n, dim_in = x.shape
    nh = num_heads
    assert dim_k % nh == 0 and dim_v % nh == 0
    out_dtype = x.dtype

    # Pre-cast MXU operands in the wrapper: halves HBM->VMEM DMA bytes on the
    # bf16 path and removes per-grid-step casts of the full weight slab.
    x = x.astype(compute_dtype)
    w_qkv = w_qkv.astype(compute_dtype)

    tq = _pick_q_tile(n, q_tile)
    q_tiles = n // tq

    # v7x megacore: keep >= 2 units of "parallel" grid work when batch == 1 by
    # splitting q tiles into a parallel chunk axis and a sequential axis
    # (at most one K/V projection recompute per chunk/core).
    if batch == 1 and q_tiles >= 2 and q_tiles % 2 == 0:
        q_par, q_seq = 2, q_tiles // 2
    else:
        q_par, q_seq = 1, q_tiles
    use_scratch = q_seq > 1           # K/V cached in VMEM across the seq axis

    recip_approx = compute_dtype != jnp.float32

    kernel = _make_mhsa_kernel(n, dim_in, dim_k, dim_v, nh, tq, q_seq,
                               compute_dtype, use_scratch, recip_approx)

    scratch_shapes = ([pltpu.VMEM((n, dim_k + dim_v), compute_dtype)]
                      if use_scratch else [])

    # Packed weights: constant block index -> single-buffered if supported
    # (double-buffering a never-changing block is pure VMEM waste).
    w_block = (dim_in, 2 * dim_k + dim_v)
    w_map = lambda b, qp, qs: (0, 0)
    try:
        w_spec = pl.BlockSpec(w_block, w_map,
                              pipeline_mode=pl.Buffered(buffer_count=1))
    except Exception:
        w_spec = pl.BlockSpec(w_block, w_map)

    return pl.pallas_call(
        kernel,
        out_shape=jax.ShapeDtypeStruct((batch, n, dim_v), out_dtype),
        grid_spec=pltpu.PrefetchScalarGridSpec(
            num_scalar_prefetch=0,
            grid=(batch, q_par, q_seq),
            in_specs=[
                # Full sequence (K/V projection needs all rows); block index
                # changes only with the batch -> fetched once per batch.
                pl.BlockSpec((1, n, dim_in), lambda b, qp, qs: (b, 0, 0)),
                w_spec,
            ],
            out_specs=pl.BlockSpec((1, tq, dim_v),
                                   lambda b, qp, qs: (b, qp * q_seq + qs, 0)),
            scratch_shapes=scratch_shapes,
        ),
        compiler_params=pltpu.CompilerParams(
            dimension_semantics=("parallel", "parallel", "arbitrary"),
            vmem_limit_bytes=_vmem_limit_bytes(),
        ),
    )(x, w_qkv)


def _reference(x, wq, wk, wv, num_heads):
    batch, n, dim_in = x.shape
    dim_k = wq.shape[1]
    dim_v = wv.shape[1]
    nh = num_heads
    dk = dim_k // nh
    dv = dim_v // nh
    norm = 1.0 / math.sqrt(dk)
    q = (x @ wq).reshape(batch, n, nh, dk).transpose(0, 2, 1, 3)
    k = (x @ wk).reshape(batch, n, nh, dk).transpose(0, 2, 1, 3)
    v = (x @ wv).reshape(batch, n, nh, dv).transpose(0, 2, 1, 3)
    dist = jnp.einsum('bhqd,bhkd->bhqk', q, k) * norm
    dist = jax.nn.softmax(dist, axis=-1)
    att = jnp.einsum('bhqk,bhkd->bhqd', dist, v)
    return att.transpose(0, 2, 1, 3).reshape(batch, n, dim_v)


if __name__ == "__main__":
    keys = jax.random.split(jax.random.PRNGKey(0), 8)

    # --- Test 1: module-default small shapes (fused whole-sequence path). ---
    batch, n = 2, 8
    dim_in, dim_k, dim_v, num_heads = 32, 32, 32, 8

    x = jax.random.normal(keys[0], (batch, n, dim_in), dtype=jnp.float32)
    # nn.Linear weight is (out, in); we hold the transposed (in, out) form.
    bound = 1.0 / math.sqrt(dim_in)
    wq = jax.random.uniform(keys[1], (dim_in, dim_k), jnp.float32, -bound, bound)
    wk = jax.random.uniform(keys[2], (dim_in, dim_k), jnp.float32, -bound, bound)
    wv = jax.random.uniform(keys[3], (dim_in, dim_v), jnp.float32, -bound, bound)

    ref = _reference(x, wq, wk, wv, num_heads)

    # Default bf16 MXU-operand path (f32 accumulation / softmax).
    w_bf16 = pack_qkv_weights(wq, wk, wv, num_heads, dtype=jnp.bfloat16)
    out_bf16 = multi_head_self_attention(x, w_bf16, dim_k=dim_k, dim_v=dim_v,
                                         num_heads=num_heads)
    out_bf16 = jax.block_until_ready(out_bf16)
    assert out_bf16.shape == (batch, n, dim_v)
    assert jnp.allclose(out_bf16, ref, atol=5e-2, rtol=5e-2), "bf16 mismatch"

    # f32 operand path (exact reciprocal), tighter check.
    w_f32 = pack_qkv_weights(wq, wk, wv, num_heads, dtype=jnp.float32)
    out_f32 = multi_head_self_attention(x, w_f32, dim_k=dim_k, dim_v=dim_v,
                                        num_heads=num_heads,
                                        compute_dtype=jnp.float32)
    out_f32 = jax.block_until_ready(out_f32)
    assert out_f32.shape == (batch, n, dim_v)
    assert jnp.allclose(out_f32, ref, atol=5e-3, rtol=5e-3), "f32 mismatch"

    # --- Test 2: q-tiled path (cached K/V scratch, q-chunk split, per-head
    #             lane-aligned stores). ---
    b2, n2, di2, dk2, dv2, nh2 = 1, 256, 128, 128, 256, 2
    x2 = jax.random.normal(keys[4], (b2, n2, di2), dtype=jnp.float32)
    bound2 = 1.0 / math.sqrt(di2)
    wq2 = jax.random.uniform(keys[5], (di2, dk2), jnp.float32, -bound2, bound2)
    wk2 = jax.random.uniform(keys[6], (di2, dk2), jnp.float32, -bound2, bound2)
    wv2 = jax.random.uniform(keys[7], (di2, dv2), jnp.float32, -bound2, bound2)

    ref2 = _reference(x2, wq2, wk2, wv2, nh2)
    w2 = pack_qkv_weights(wq2, wk2, wv2, nh2, dtype=jnp.float32)
    out2 = multi_head_self_attention(x2, w2, dim_k=dk2, dim_v=dv2,
                                     num_heads=nh2,
                                     compute_dtype=jnp.float32, q_tile=64)
    out2 = jax.block_until_ready(out2)
    assert out2.shape == (b2, n2, dv2)
    assert jnp.allclose(out2, ref2, atol=5e-2, rtol=5e-2), "tiled mismatch"

    print("KERNEL_OK")
</pallas_src>

<mosaic_0001>
module attributes {stable_mosaic.version = 11 : i64} {
  func.func @kernel(%arg0: i32, %arg1: i32, %arg2: i32, %arg3: memref<1x8x32xbf16, #tpu.memory_space<vmem>>, %arg4: memref<32x96xbf16, #tpu.memory_space<vmem>>, %arg5: memref<1x8x32xf32, #tpu.memory_space<vmem>>) attributes {dimension_semantics = [#tpu.dimension_semantics<parallel>, #tpu.dimension_semantics<parallel>, #tpu.dimension_semantics<arbitrary>], iteration_bounds = array<i64: 2, 1, 1>, scalar_prefetch = 0 : i64, scratch_operands = 0 : i64, tpu.core_type = #tpu.core_type<tc>, window_params = [{transform_indices = @transform_0, window_bounds = array<i64: 1, 8, 32>}, {pipeline_mode = #tpu.pipeline_mode<synchronous>, transform_indices = @transform_1, window_bounds = array<i64: 32, 96>}, {transform_indices = @transform_2, window_bounds = array<i64: 1, 8, 32>}]} {
    %c0 = arith.constant 0 : index
    %c0_0 = arith.constant 0 : index
    %c0_1 = arith.constant 0 : index
    %0 = vector.load %arg3[%c0, %c0_0, %c0_1] : memref<1x8x32xbf16, #tpu.memory_space<vmem>>, vector<1x8x32xbf16>
    %1 = vector.shape_cast %0 : vector<1x8x32xbf16> to vector<8x32xbf16>
    %c0_2 = arith.constant 0 : index
    %c0_3 = arith.constant 0 : index
    %2 = vector.load %arg4[%c0_2, %c0_3] : memref<32x96xbf16, #tpu.memory_space<vmem>>, vector<32x96xbf16>
    %cst = arith.constant dense<0.000000e+00> : vector<8x96xf32>
    %3 = tpu.matmul %1, %2, %cst {dimension_numbers = #tpu.dot_dimension_numbers<[1], [0], [0], [1], [0, 0, 1, 1], [], []>} : vector<8x32xbf16>, vector<32x96xbf16>, vector<8x96xf32> -> vector<8x96xf32>
    %4 = arith.truncf %3 : vector<8x96xf32> to vector<8x96xbf16>
    %5 = vector.extract_strided_slice %4 {offsets = [0, 0], sizes = [8, 32], strides = [1, 1]} : vector<8x96xbf16> to vector<8x32xbf16>
    %6 = vector.extract_strided_slice %4 {offsets = [0, 32], sizes = [8, 64], strides = [1, 1]} : vector<8x96xbf16> to vector<8x64xbf16>
    %7 = vector.extract_strided_slice %5 {offsets = [0, 0], sizes = [8, 4], strides = [1, 1]} : vector<8x32xbf16> to vector<8x4xbf16>
    %8 = vector.extract_strided_slice %6 {offsets = [0, 0], sizes = [8, 4], strides = [1, 1]} : vector<8x64xbf16> to vector<8x4xbf16>
    %9 = vector.extract_strided_slice %6 {offsets = [0, 32], sizes = [8, 4], strides = [1, 1]} : vector<8x64xbf16> to vector<8x4xbf16>
    %cst_4 = arith.constant dense<0.000000e+00> : vector<8x8xf32>
    %10 = tpu.matmul %7, %8, %cst_4 {dimension_numbers = #tpu.dot_dimension_numbers<[1], [1], [0], [0], [0, 0, 1, 0], [], []>} : vector<8x4xbf16>, vector<8x4xbf16>, vector<8x8xf32> -> vector<8x8xf32>
    %cst_5 = arith.constant dense<0xFF800000> : vector<8xf32>
    %11 = vector.multi_reduction <maximumf>, %10, %cst_5 [1] : vector<8x8xf32> to vector<8xf32>
    %12 = vector.shape_cast %11 : vector<8xf32> to vector<8x1xf32>
    %13 = vector.broadcast %12 : vector<8x1xf32> to vector<8x8xf32>
    %14 = arith.subf %10, %13 : vector<8x8xf32>
    %15 = math.exp %14 : vector<8x8xf32>
    %cst_6 = arith.constant dense<0.000000e+00> : vector<8xf32>
    %16 = vector.multi_reduction <add>, %15, %cst_6 [1] : vector<8x8xf32> to vector<8xf32>
    %17 = vector.shape_cast %16 : vector<8xf32> to vector<8x1xf32>
    %18 = arith.truncf %15 : vector<8x8xf32> to vector<8x8xbf16>
    %cst_7 = arith.constant dense<0.000000e+00> : vector<8x4xf32>
    %19 = tpu.matmul %18, %9, %cst_7 {dimension_numbers = #tpu.dot_dimension_numbers<[1], [0], [0], [1], [0, 0, 1, 1], [], []>} : vector<8x8xbf16>, vector<8x4xbf16>, vector<8x4xf32> -> vector<8x4xf32>
    %20 = tpu.reciprocal %17 {approx = true} : vector<8x1xf32> -> vector<8x1xf32>
    %21 = vector.broadcast %20 : vector<8x1xf32> to vector<8x4xf32>
    %22 = arith.mulf %19, %21 : vector<8x4xf32>
    %23 = vector.extract_strided_slice %5 {offsets = [0, 4], sizes = [8, 4], strides = [1, 1]} : vector<8x32xbf16> to vector<8x4xbf16>
    %24 = vector.extract_strided_slice %6 {offsets = [0, 4], sizes = [8, 4], strides = [1, 1]} : vector<8x64xbf16> to vector<8x4xbf16>
    %25 = vector.extract_strided_slice %6 {offsets = [0, 36], sizes = [8, 4], strides = [1, 1]} : vector<8x64xbf16> to vector<8x4xbf16>
    %cst_8 = arith.constant dense<0.000000e+00> : vector<8x8xf32>
    %26 = tpu.matmul %23, %24, %cst_8 {dimension_numbers = #tpu.dot_dimension_numbers<[1], [1], [0], [0], [0, 0, 1, 0], [], []>} : vector<8x4xbf16>, vector<8x4xbf16>, vector<8x8xf32> -> vector<8x8xf32>
    %cst_9 = arith.constant dense<0xFF800000> : vector<8xf32>
    %27 = vector.multi_reduction <maximumf>, %26, %cst_9 [1] : vector<8x8xf32> to vector<8xf32>
    %28 = vector.shape_cast %27 : vector<8xf32> to vector<8x1xf32>
    %29 = vector.broadcast %28 : vector<8x1xf32> to vector<8x8xf32>
    %30 = arith.subf %26, %29 : vector<8x8xf32>
    %31 = math.exp %30 : vector<8x8xf32>
    %cst_10 = arith.constant dense<0.000000e+00> : vector<8xf32>
    %32 = vector.multi_reduction <add>, %31, %cst_10 [1] : vector<8x8xf32> to vector<8xf32>
    %33 = vector.shape_cast %32 : vector<8xf32> to vector<8x1xf32>
    %34 = arith.truncf %31 : vector<8x8xf32> to vector<8x8xbf16>
    %cst_11 = arith.constant dense<0.000000e+00> : vector<8x4xf32>
    %35 = tpu.matmul %34, %25, %cst_11 {dimension_numbers = #tpu.dot_dimension_numbers<[1], [0], [0], [1], [0, 0, 1, 1], [], []>} : vector<8x8xbf16>, vector<8x4xbf16>, vector<8x4xf32> -> vector<8x4xf32>
    %36 = tpu.reciprocal %33 {approx = true} : vector<8x1xf32> -> vector<8x1xf32>
    %37 = vector.broadcast %36 : vector<8x1xf32> to vector<8x4xf32>
    %38 = arith.mulf %35, %37 : vector<8x4xf32>
    %39 = vector.extract_strided_slice %5 {offsets = [0, 8], sizes = [8, 4], strides = [1, 1]} : vector<8x32xbf16> to vector<8x4xbf16>
    %40 = vector.extract_strided_slice %6 {offsets = [0, 8], sizes = [8, 4], strides = [1, 1]} : vector<8x64xbf16> to vector<8x4xbf16>
    %41 = vector.extract_strided_slice %6 {offsets = [0, 40], sizes = [8, 4], strides = [1, 1]} : vector<8x64xbf16> to vector<8x4xbf16>
    %cst_12 = arith.constant dense<0.000000e+00> : vector<8x8xf32>
    %42 = tpu.matmul %39, %40, %cst_12 {dimension_numbers = #tpu.dot_dimension_numbers<[1], [1], [0], [0], [0, 0, 1, 0], [], []>} : vector<8x4xbf16>, vector<8x4xbf16>, vector<8x8xf32> -> vector<8x8xf32>
    %cst_13 = arith.constant dense<0xFF800000> : vector<8xf32>
    %43 = vector.multi_reduction <maximumf>, %42, %cst_13 [1] : vector<8x8xf32> to vector<8xf32>
    %44 = vector.shape_cast %43 : vector<8xf32> to vector<8x1xf32>
    %45 = vector.broadcast %44 : vector<8x1xf32> to vector<8x8xf32>
    %46 = arith.subf %42, %45 : vector<8x8xf32>
    %47 = math.exp %46 : vector<8x8xf32>
    %cst_14 = arith.constant dense<0.000000e+00> : vector<8xf32>
    %48 = vector.multi_reduction <add>, %47, %cst_14 [1] : vector<8x8xf32> to vector<8xf32>
    %49 = vector.shape_cast %48 : vector<8xf32> to vector<8x1xf32>
    %50 = arith.truncf %47 : vector<8x8xf32> to vector<8x8xbf16>
    %cst_15 = arith.constant dense<0.000000e+00> : vector<8x4xf32>
    %51 = tpu.matmul %50, %41, %cst_15 {dimension_numbers = #tpu.dot_dimension_numbers<[1], [0], [0], [1], [0, 0, 1, 1], [], []>} : vector<8x8xbf16>, vector<8x4xbf16>, vector<8x4xf32> -> vector<8x4xf32>
    %52 = tpu.reciprocal %49 {approx = true} : vector<8x1xf32> -> vector<8x1xf32>
    %53 = vector.broadcast %52 : vector<8x1xf32> to vector<8x4xf32>
    %54 = arith.mulf %51, %53 : vector<8x4xf32>
    %55 = vector.extract_strided_slice %5 {offsets = [0, 12], sizes = [8, 4], strides = [1, 1]} : vector<8x32xbf16> to vector<8x4xbf16>
    %56 = vector.extract_strided_slice %6 {offsets = [0, 12], sizes = [8, 4], strides = [1, 1]} : vector<8x64xbf16> to vector<8x4xbf16>
    %57 = vector.extract_strided_slice %6 {offsets = [0, 44], sizes = [8, 4], strides = [1, 1]} : vector<8x64xbf16> to vector<8x4xbf16>
    %cst_16 = arith.constant dense<0.000000e+00> : vector<8x8xf32>
    %58 = tpu.matmul %55, %56, %cst_16 {dimension_numbers = #tpu.dot_dimension_numbers<[1], [1], [0], [0], [0, 0, 1, 0], [], []>} : vector<8x4xbf16>, vector<8x4xbf16>, vector<8x8xf32> -> vector<8x8xf32>
    %cst_17 = arith.constant dense<0xFF800000> : vector<8xf32>
    %59 = vector.multi_reduction <maximumf>, %58, %cst_17 [1] : vector<8x8xf32> to vector<8xf32>
    %60 = vector.shape_cast %59 : vector<8xf32> to vector<8x1xf32>
    %61 = vector.broadcast %60 : vector<8x1xf32> to vector<8x8xf32>
    %62 = arith.subf %58, %61 : vector<8x8xf32>
    %63 = math.exp %62 : vector<8x8xf32>
    %cst_18 = arith.constant dense<0.000000e+00> : vector<8xf32>
    %64 = vector.multi_reduction <add>, %63, %cst_18 [1] : vector<8x8xf32> to vector<8xf32>
    %65 = vector.shape_cast %64 : vector<8xf32> to vector<8x1xf32>
    %66 = arith.truncf %63 : vector<8x8xf32> to vector<8x8xbf16>
    %cst_19 = arith.constant dense<0.000000e+00> : vector<8x4xf32>
    %67 = tpu.matmul %66, %57, %cst_19 {dimension_numbers = #tpu.dot_dimension_numbers<[1], [0], [0], [1], [0, 0, 1, 1], [], []>} : vector<8x8xbf16>, vector<8x4xbf16>, vector<8x4xf32> -> vector<8x4xf32>
    %68 = tpu.reciprocal %65 {approx = true} : vector<8x1xf32> -> vector<8x1xf32>
    %69 = vector.broadcast %68 : vector<8x1xf32> to vector<8x4xf32>
    %70 = arith.mulf %67, %69 : vector<8x4xf32>
    %71 = vector.extract_strided_slice %5 {offsets = [0, 16], sizes = [8, 4], strides = [1, 1]} : vector<8x32xbf16> to vector<8x4xbf16>
    %72 = vector.extract_strided_slice %6 {offsets = [0, 16], sizes = [8, 4], strides = [1, 1]} : vector<8x64xbf16> to vector<8x4xbf16>
    %73 = vector.extract_strided_slice %6 {offsets = [0, 48], sizes = [8, 4], strides = [1, 1]} : vector<8x64xbf16> to vector<8x4xbf16>
    %cst_20 = arith.constant dense<0.000000e+00> : vector<8x8xf32>
    %74 = tpu.matmul %71, %72, %cst_20 {dimension_numbers = #tpu.dot_dimension_numbers<[1], [1], [0], [0], [0, 0, 1, 0], [], []>} : vector<8x4xbf16>, vector<8x4xbf16>, vector<8x8xf32> -> vector<8x8xf32>
    %cst_21 = arith.constant dense<0xFF800000> : vector<8xf32>
    %75 = vector.multi_reduction <maximumf>, %74, %cst_21 [1] : vector<8x8xf32> to vector<8xf32>
    %76 = vector.shape_cast %75 : vector<8xf32> to vector<8x1xf32>
    %77 = vector.broadcast %76 : vector<8x1xf32> to vector<8x8xf32>
    %78 = arith.subf %74, %77 : vector<8x8xf32>
    %79 = math.exp %78 : vector<8x8xf32>
    %cst_22 = arith.constant dense<0.000000e+00> : vector<8xf32>
    %80 = vector.multi_reduction <add>, %79, %cst_22 [1] : vector<8x8xf32> to vector<8xf32>
    %81 = vector.shape_cast %80 : vector<8xf32> to vector<8x1xf32>
    %82 = arith.truncf %79 : vector<8x8xf32> to vector<8x8xbf16>
    %cst_23 = arith.constant dense<0.000000e+00> : vector<8x4xf32>
    %83 = tpu.matmul %82, %73, %cst_23 {dimension_numbers = #tpu.dot_dimension_numbers<[1], [0], [0], [1], [0, 0, 1, 1], [], []>} : vector<8x8xbf16>, vector<8x4xbf16>, vector<8x4xf32> -> vector<8x4xf32>
    %84 = tpu.reciprocal %81 {approx = true} : vector<8x1xf32> -> vector<8x1xf32>
    %85 = vector.broadcast %84 : vector<8x1xf32> to vector<8x4xf32>
    %86 = arith.mulf %83, %85 : vector<8x4xf32>
    %87 = vector.extract_strided_slice %5 {offsets = [0, 20], sizes = [8, 4], strides = [1, 1]} : vector<8x32xbf16> to vector<8x4xbf16>
    %88 = vector.extract_strided_slice %6 {offsets = [0, 20], sizes = [8, 4], strides = [1, 1]} : vector<8x64xbf16> to vector<8x4xbf16>
    %89 = vector.extract_strided_slice %6 {offsets = [0, 52], sizes = [8, 4], strides = [1, 1]} : vector<8x64xbf16> to vector<8x4xbf16>
    %cst_24 = arith.constant dense<0.000000e+00> : vector<8x8xf32>
    %90 = tpu.matmul %87, %88, %cst_24 {dimension_numbers = #tpu.dot_dimension_numbers<[1], [1], [0], [0], [0, 0, 1, 0], [], []>} : vector<8x4xbf16>, vector<8x4xbf16>, vector<8x8xf32> -> vector<8x8xf32>
    %cst_25 = arith.constant dense<0xFF800000> : vector<8xf32>
    %91 = vector.multi_reduction <maximumf>, %90, %cst_25 [1] : vector<8x8xf32> to vector<8xf32>
    %92 = vector.shape_cast %91 : vector<8xf32> to vector<8x1xf32>
    %93 = vector.broadcast %92 : vector<8x1xf32> to vector<8x8xf32>
    %94 = arith.subf %90, %93 : vector<8x8xf32>
    %95 = math.exp %94 : vector<8x8xf32>
    %cst_26 = arith.constant dense<0.000000e+00> : vector<8xf32>
    %96 = vector.multi_reduction <add>, %95, %cst_26 [1] : vector<8x8xf32> to vector<8xf32>
    %97 = vector.shape_cast %96 : vector<8xf32> to vector<8x1xf32>
    %98 = arith.truncf %95 : vector<8x8xf32> to vector<8x8xbf16>
    %cst_27 = arith.constant dense<0.000000e+00> : vector<8x4xf32>
    %99 = tpu.matmul %98, %89, %cst_27 {dimension_numbers = #tpu.dot_dimension_numbers<[1], [0], [0], [1], [0, 0, 1, 1], [], []>} : vector<8x8xbf16>, vector<8x4xbf16>, vector<8x4xf32> -> vector<8x4xf32>
    %100 = tpu.reciprocal %97 {approx = true} : vector<8x1xf32> -> vector<8x1xf32>
    %101 = vector.broadcast %100 : vector<8x1xf32> to vector<8x4xf32>
    %102 = arith.mulf %99, %101 : vector<8x4xf32>
    %103 = vector.extract_strided_slice %5 {offsets = [0, 24], sizes = [8, 4], strides = [1, 1]} : vector<8x32xbf16> to vector<8x4xbf16>
    %104 = vector.extract_strided_slice %6 {offsets = [0, 24], sizes = [8, 4], strides = [1, 1]} : vector<8x64xbf16> to vector<8x4xbf16>
    %105 = vector.extract_strided_slice %6 {offsets = [0, 56], sizes = [8, 4], strides = [1, 1]} : vector<8x64xbf16> to vector<8x4xbf16>
    %cst_28 = arith.constant dense<0.000000e+00> : vector<8x8xf32>
    %106 = tpu.matmul %103, %104, %cst_28 {dimension_numbers = #tpu.dot_dimension_numbers<[1], [1], [0], [0], [0, 0, 1, 0], [], []>} : vector<8x4xbf16>, vector<8x4xbf16>, vector<8x8xf32> -> vector<8x8xf32>
    %cst_29 = arith.constant dense<0xFF800000> : vector<8xf32>
    %107 = vector.multi_reduction <maximumf>, %106, %cst_29 [1] : vector<8x8xf32> to vector<8xf32>
    %108 = vector.shape_cast %107 : vector<8xf32> to vector<8x1xf32>
    %109 = vector.broadcast %108 : vector<8x1xf32> to vector<8x8xf32>
    %110 = arith.subf %106, %109 : vector<8x8xf32>
    %111 = math.exp %110 : vector<8x8xf32>
    %cst_30 = arith.constant dense<0.000000e+00> : vector<8xf32>
    %112 = vector.multi_reduction <add>, %111, %cst_30 [1] : vector<8x8xf32> to vector<8xf32>
    %113 = vector.shape_cast %112 : vector<8xf32> to vector<8x1xf32>
    %114 = arith.truncf %111 : vector<8x8xf32> to vector<8x8xbf16>
    %cst_31 = arith.constant dense<0.000000e+00> : vector<8x4xf32>
    %115 = tpu.matmul %114, %105, %cst_31 {dimension_numbers = #tpu.dot_dimension_numbers<[1], [0], [0], [1], [0, 0, 1, 1], [], []>} : vector<8x8xbf16>, vector<8x4xbf16>, vector<8x4xf32> -> vector<8x4xf32>
    %116 = tpu.reciprocal %113 {approx = true} : vector<8x1xf32> -> vector<8x1xf32>
    %117 = vector.broadcast %116 : vector<8x1xf32> to vector<8x4xf32>
    %118 = arith.mulf %115, %117 : vector<8x4xf32>
    %119 = vector.extract_strided_slice %5 {offsets = [0, 28], sizes = [8, 4], strides = [1, 1]} : vector<8x32xbf16> to vector<8x4xbf16>
    %120 = vector.extract_strided_slice %6 {offsets = [0, 28], sizes = [8, 4], strides = [1, 1]} : vector<8x64xbf16> to vector<8x4xbf16>
    %121 = vector.extract_strided_slice %6 {offsets = [0, 60], sizes = [8, 4], strides = [1, 1]} : vector<8x64xbf16> to vector<8x4xbf16>
    %cst_32 = arith.constant dense<0.000000e+00> : vector<8x8xf32>
    %122 = tpu.matmul %119, %120, %cst_32 {dimension_numbers = #tpu.dot_dimension_numbers<[1], [1], [0], [0], [0, 0, 1, 0], [], []>} : vector<8x4xbf16>, vector<8x4xbf16>, vector<8x8xf32> -> vector<8x8xf32>
    %cst_33 = arith.constant dense<0xFF800000> : vector<8xf32>
    %123 = vector.multi_reduction <maximumf>, %122, %cst_33 [1] : vector<8x8xf32> to vector<8xf32>
    %124 = vector.shape_cast %123 : vector<8xf32> to vector<8x1xf32>
    %125 = vector.broadcast %124 : vector<8x1xf32> to vector<8x8xf32>
    %126 = arith.subf %122, %125 : vector<8x8xf32>
    %127 = math.exp %126 : vector<8x8xf32>
    %cst_34 = arith.constant dense<0.000000e+00> : vector<8xf32>
    %128 = vector.multi_reduction <add>, %127, %cst_34 [1] : vector<8x8xf32> to vector<8xf32>
    %129 = vector.shape_cast %128 : vector<8xf32> to vector<8x1xf32>
    %130 = arith.truncf %127 : vector<8x8xf32> to vector<8x8xbf16>
    %cst_35 = arith.constant dense<0.000000e+00> : vector<8x4xf32>
    %131 = tpu.matmul %130, %121, %cst_35 {dimension_numbers = #tpu.dot_dimension_numbers<[1], [0], [0], [1], [0, 0, 1, 1], [], []>} : vector<8x8xbf16>, vector<8x4xbf16>, vector<8x4xf32> -> vector<8x4xf32>
    %132 = tpu.reciprocal %129 {approx = true} : vector<8x1xf32> -> vector<8x1xf32>
    %133 = vector.broadcast %132 : vector<8x1xf32> to vector<8x4xf32>
    %134 = arith.mulf %131, %133 : vector<8x4xf32>
    %135 = tpu.concatenate %22, %38, %54, %70, %86, %102, %118, %134 in 1 : vector<8x4xf32>, vector<8x4xf32>, vector<8x4xf32>, vector<8x4xf32>, vector<8x4xf32>, vector<8x4xf32>, vector<8x4xf32>, vector<8x4xf32> -> vector<8x32xf32>
    %c0_36 = arith.constant 0 : index
    %c0_37 = arith.constant 0 : index
    %c0_38 = arith.constant 0 : index
    %136 = vector.load %arg5[%c0_36, %c0_37, %c0_38] : memref<1x8x32xf32, #tpu.memory_space<vmem>>, vector<1x8x32xf32>
    %137 = vector.shape_cast %136 : vector<1x8x32xf32> to vector<8x32xf32>
    %138 = vector.shape_cast %135 : vector<8x32xf32> to vector<1x8x32xf32>
    tpu.vector_store %arg5[%c0_36, %c0_37, %c0_38], %138 {strides = array<i32>} : memref<1x8x32xf32, #tpu.memory_space<vmem>>, vector<1x8x32xf32>,
    return
  }
  func.func @transform_0(%arg0: i32, %arg1: i32, %arg2: i32) -> (i32, i32, i32) {
    %c0_i32 = arith.constant 0 : i32
    %c0_i32_0 = arith.constant 0 : i32
    %c0_i32_1 = arith.constant 0 : i32
    return %arg0, %c0_i32, %c0_i32_0 : i32, i32, i32
  }
  func.func @transform_1(%arg0: i32, %arg1: i32, %arg2: i32) -> (i32, i32) {
    %c0_i32 = arith.constant 0 : i32
    %c0_i32_0 = arith.constant 0 : i32
    %c0_i32_1 = arith.constant 0 : i32
    return %c0_i32, %c0_i32_0 : i32, i32
  }
  func.func @transform_2(%arg0: i32, %arg1: i32, %arg2: i32) -> (i32, i32, i32) {
    %c1_i32 = arith.constant 1 : i32
    %0 = arith.muli %arg1, %c1_i32 : i32
    %1 = arith.addi %0, %arg2 : i32
    %c0_i32 = arith.constant 0 : i32
    %c0_i32_0 = arith.constant 0 : i32
    return %arg0, %1, %c0_i32 : i32, i32, i32
  }
}

</mosaic_0001>

<llo_original>
// kernel: multi_head_self_attention.1
$region0: #{multi_head_self_attention.1}
  #allocation0 [shape = 'u32[]', space=smem, size = 0x4, offset = 0x4, fixed_abs, tag = 'smem constant byte address 0x4 - core index']
  #allocation1 [shape = 'u32[144,128]{1,0:T(1,128)}', space=vmem, size = 0x12000, scoped, tag = 'internal scratch']
  %s0 = inlined_call_operand.vmem [shape: bf16[2,8,32], index: 0, kind: input, shape index: {}]
  %s1 = inlined_call_operand.vmem [shape: bf16[32,96], index: 1, kind: input, shape index: {}]
  %s2 = inlined_call_operand.hbm [shape: f32[2,8,32], index: 2, kind: output, shape index: {}]
  %s3 = sld [smem:[#allocation0]]
  $region41: #{multi_head_self_attention.1} parent=0
    _
  %s5 = ssub.s32 1, %s3
  %s6 = scalar_select 0, %s5, %s3
  $region1: #{multi_head_self_attention.1} parent=0
    #allocation2 [shape = 'u8[8192]{0}', space=vmem, size = 0x2000, scoped, tag = 'output window, operand 0']
    #allocation3 [shape = 's32[2]{0}', space=sflag, size = 0x8, scoped, tag = 'scoped memory for multi_head_self_attention.1']
    %7 = vsyncpa [#allocation3], 0
    %s8 = scalar_lea.sflag [#allocation3], 1
    %9 = vsyncpa %s8, 0
    loop: start=0, step=1, limit=4
    $region2: #{multi_head_self_attention.1} parent=1 // loop_pre_header
      _
    $region3: #{multi_head_self_attention.1} parent=1 // loop_header
      %s11 = sphi 0, %s15
      %p12 = scmp.ge.s32.totalorder %s11, 4
      %s18 = sphi 0, %s37
      %s19 = sphi 0, %s33
      %s20 = sphi 0, %s29
      %s21 = sphi 0, %s18
      %s22 = sphi 0, %s19
      %s23 = sphi 0, %s20
      %s24 = sphi 0, %s21
      %s25 = sphi 0, %s22
      %s26 = sphi 0, %s23
      %s40 = sphi 0, %s42
      %s43 = sphi 0, %s40
      %s44 = sphi 0, %s43
      %s60 = sphi 0, %s44
      %s64 = sphi 0, %s64
      %s66 = sphi 0, %s64
      %s67 = sphi 0, %s66
      %s81 = sphi 0, %s67
      %s91 = sphi 0, %s93
      %s94 = sphi 0, %s91
      %s95 = sphi 0, %s94
      %s111 = sphi 0, %s95
    $region4: #{multi_head_self_attention.1} parent=1 // loop_header_branch
      %14 = sbr.rel (%p12) target = $region8
    $region5: #{multi_head_self_attention.1} parent=1 // loop_body
      %s16 = ssub.s32 %s11, 1
      %s17 = ssub.s32 %s11, 2
      %s27 = sadd.s32 1, %s20
      %p28 = scmp.ge.s32.totalorder %s27, 1
      %s29 = scalar_select %p28, 0, %s27
      %s30 = sadd.s32 1, %s19
      %s31 = scalar_select %p28, %s30, %s19
      %p32 = scmp.ge.s32.totalorder %s31, 1
      %s33 = scalar_select %p32, 0, %s31
      %s34 = sadd.s32 1, %s18
      %s35 = scalar_select %p32, %s34, %s18
      %p36 = scmp.ge.s32.totalorder %s35, 2
      %s37 = scalar_select %p36, 0, %s35
      %s38 = ssub.s32 %s18, %s37
      %p39 = scmp.eq.s32.totalorder %s38, 0
      %s41 = sadd.s32 %s40, 1
      %s42 = scalar_select %p39, %s40, %s41
      %p45 = pneg %p39
      %p46 = scmp.eq.s32.totalorder %s11, 1
      %p47 = por %p45, %p46
      %p48 = scmp.ne.s32.totalorder %s40, %s43
      %p49 = scmp.eq.s32.totalorder %s11, 0
      %p50 = por %p48, %p49
      %p51 = scmp.ne.s32.totalorder %s40, %s43
      %p52 = scmp.eq.s32.totalorder %s16, 1
      %p53 = por %p51, %p52
      %p54 = scmp.ne.s32.totalorder %s43, %s44
      %p55 = scmp.eq.s32.totalorder %s16, 0
      %p56 = por %p54, %p55
      %p57 = scmp.ne.s32.totalorder %s43, %s44
      %p58 = scmp.eq.s32.totalorder %s17, 1
      %p59 = por %p57, %p58
      %p61 = scmp.ne.s32.totalorder %s44, %s60
      %p62 = scmp.eq.s32.totalorder %s17, 0
      %p63 = por %p61, %p62
      %s65 = sadd.s32 %s64, 1
      %p68 = scmp.eq.s32.totalorder %s11, 1
      %p69 = scmp.ne.s32.totalorder %s64, %s66
      %p70 = scmp.eq.s32.totalorder %s11, 0
      %p71 = por %p69, %p70
      %p72 = scmp.ne.s32.totalorder %s64, %s66
      %p73 = scmp.eq.s32.totalorder %s16, 1
      %p74 = por %p72, %p73
      %p75 = scmp.ne.s32.totalorder %s66, %s67
      %p76 = scmp.eq.s32.totalorder %s16, 0
      %p77 = por %p75, %p76
      %p78 = scmp.ne.s32.totalorder %s66, %s67
      %p79 = scmp.eq.s32.totalorder %s17, 1
      %p80 = por %p78, %p79
      %p82 = scmp.ne.s32.totalorder %s67, %s81
      %p83 = scmp.eq.s32.totalorder %s17, 0
      %p84 = por %p82, %p83
      %s85 = sadd.s32 %s19, %s20
      %s86 = sadd.s32 %s33, %s29
      %s87 = ssub.s32 %s18, %s37
      %s88 = ssub.s32 %s85, %s86
      %s89 = sor.u32 %s87, %s88
      %p90 = scmp.eq.s32.totalorder %s89, 0
      %s92 = sadd.s32 %s91, 1
      %s93 = scalar_select %p90, %s91, %s92
      %p96 = pneg %p90
      %p97 = scmp.eq.s32.totalorder %s11, 1
      %p98 = por %p96, %p97
      %p99 = scmp.ne.s32.totalorder %s91, %s94
      %p100 = scmp.eq.s32.totalorder %s11, 0
      %p101 = por %p99, %p100
      %p102 = scmp.ne.s32.totalorder %s91, %s94
      %p103 = scmp.eq.s32.totalorder %s16, 1
      %p104 = por %p102, %p103
      %p105 = scmp.ne.s32.totalorder %s94, %s95
      %p106 = scmp.eq.s32.totalorder %s16, 0
      %p107 = por %p105, %p106
      %p108 = scmp.ne.s32.totalorder %s94, %s95
      %p109 = scmp.eq.s32.totalorder %s17, 1
      %p110 = por %p108, %p109
      %p112 = scmp.ne.s32.totalorder %s95, %s111
      %p113 = scmp.eq.s32.totalorder %s17, 0
      %p114 = por %p112, %p113
      %p115 = scmp.le.s32.totalorder 1, %s11
      %p116 = scmp.lt.s32.totalorder %s11, 3
      %p117 = pnand %p115, %p116
      %p118 = pneg %p117
      // Predicated region
      $region9: #{multi_head_self_attention.1} parent=5 // pred_check
        _
      $region10: #{multi_head_self_attention.1} parent=5 // pred_check_branch
        %120 = sbr.rel (%p117) target = $region12
      $region11: #{multi_head_self_attention.1} parent=5 // pred_region
        %s121 = ssub.s32 %s11, 1
        // Predicated region
        $region13: #{multi_head_self_attention.1} parent=11 // pred_check
          %p122 = pneg %p77
        $region14: #{multi_head_self_attention.1} parent=11 // pred_check_branch
          %124 = sbr.rel (%p122) target = $region16
        $region15: #{multi_head_self_attention.1} parent=11 // pred_region
          _
        $region16: #{multi_head_self_attention.1} parent=11 // pred_fallthru
          _
      $region12: #{multi_head_self_attention.1} parent=5 // pred_fallthru
        _
      %p125 = scmp.lt.s32.totalorder %s11, 2
      // Predicated region
      $region17: #{multi_head_self_attention.1} parent=5 // pred_check
        %p126 = pneg %p125
      $region18: #{multi_head_self_attention.1} parent=5 // pred_check_branch
        %128 = sbr.rel (%p126) target = $region20
      $region19: #{multi_head_self_attention.1} parent=5 // pred_region
        // Predicated region
        $region21: #{multi_head_self_attention.1} parent=19 // pred_check
          %p129 = pneg %p50
        $region22: #{multi_head_self_attention.1} parent=19 // pred_check_branch
          %131 = sbr.rel (%p129) target = $region24
        $region23: #{multi_head_self_attention.1} parent=19 // pred_region
          %p132 = scmp.lt.s32.totalorder %s18, 1
          %s133 = scalar_select %p132, %s18, 1
          %s134 = smul.addr %s133, 4
          %s135 = scalar_lea.vmem %s0, %s134
        $region24: #{multi_head_self_attention.1} parent=19 // pred_fallthru
          _
      $region20: #{multi_head_self_attention.1} parent=5 // pred_fallthru
        _
      %p136 = scmp.le.s32.totalorder 1, %s11
      %p137 = scmp.lt.s32.totalorder %s11, 3
      %p138 = pnand %p136, %p137
      %p139 = pneg %p138
      // Predicated region
      $region25: #{multi_head_self_attention.1} parent=5 // pred_check
        _
      $region26: #{multi_head_self_attention.1} parent=5 // pred_check_branch
        %141 = sbr.rel (%p138) target = $region28
      $region27: #{multi_head_self_attention.1} parent=5 // pred_region
        %s142 = ssub.s32 %s11, 1
        %p143 = scmp.lt.s32.totalorder %s21, 1
        %s144 = scalar_select %p143, %s21, 1
        %s145 = smul.addr %s144, 4
        %s146 = scalar_lea.vmem %s0, %s145
        %p147 = pneg %p56
        %p148 = pneg %p53
        %p149 = pneg %p77
        %p150 = pneg %p74
        %p151 = pneg %p107
        %p152 = pneg %p104
        %s153 = sand.u32 %s94, 1
        %s154 = scalar_lea.sflag [#allocation3], %s153
        %s155 = sand.u32 %s94, 1
        %s156 = smul.addr %s155, 8
        %s157 = scalar_lea.vmem [#allocation2], %s156
        %p158 = scmp.lt.s32.totalorder %s21, 1
        %s159 = scalar_select %p158, %s21, 1
        %s160 = smul.addr %s159, 4
        %s161 = scalar_lea.vmem %s0, %s160
        %s162 = sadd.s32 %s22, %s23
        %v164 = vld [vmem:[%s161] sm:$0xf]
        %v165 = vld [vmem:[%s1] sm:$0xf]
        %v166 = vld [vmem:[%s1 + $0x4] sm:$0xf]
        %v167 = vld [vmem:[%s1 + $0x8] sm:$0xf]
        %v168 = vld [vmem:[%s1 + $0xc] sm:$0xf]
        %v173 = vunpack.c.l.b16 %v165
        %v174 = vunpack.c.l.b16 %v166
        %v175 = vunpack.c.l.b16 %v167
        %v176 = vunpack.c.l.b16 %v168
        %v177 = vpack.c.b16 %v174, %v173
        %v178 = vpack.c.b16 %v176, %v175
        %vm181 = vcmask 261120
        %v183 = vsel %vm181, %v164, 0
        %185 = vmatprep.subr.bf16.mxu0 0
        %186 = vmatpush1.bf16.msra.mxu0 0
        %187 = vmatprep.subr.bf16.mxu0 0
        %188 = vmatpush1.bf16.msra.mxu0 0
        %189 = vmatprep.subr.bf16.mxu0 0
        %190 = vmatpush1.bf16.msra.mxu0 0
        %191 = vmatprep.subr.bf16.mxu0 0
        %192 = vmatpush1.bf16.msra.mxu0 0
        %193 = vmatprep.subr.bf16.mxu0 0
        %194 = vmatpush1.bf16.msra.mxu0 0
        %195 = vmatprep.subr.bf16.mxu0 0
        %196 = vmatpush1.bf16.msra.mxu0 0
        %197 = vmatprep.subr.bf16.mxu0 0
        %198 = vmatpush1.bf16.msra.mxu0 %v178
        %199 = vmatprep.subr.bf16.mxu0 0
        %200 = vmatpush1.bf16.msra.mxu0 %v177
        %201 = vmatprep.subr.bf16.mxu0 0
        %202 = vmatpush2.bf16.msra.mxu0 0
        %203 = vmatprep.subr.bf16.mxu0 0
        %204 = vmatpush2.bf16.msra.mxu0 0
        %205 = vmatprep.subr.bf16.mxu0 0
        %206 = vmatpush2.bf16.msra.mxu0 0
        %207 = vmatprep.subr.bf16.mxu0 0
        %208 = vmatpush2.bf16.msra.mxu0 0
        %209 = vmatprep.subr.bf16.mxu0 0
        %210 = vmatpush2.bf16.msra.mxu0 0
        %211 = vmatprep.subr.bf16.mxu0 0
        %212 = vmatpush2.bf16.msra.mxu0 0
        %213 = vmatprep.subr.bf16.mxu0 0
        %214 = vmatpush2.bf16.msra.mxu0 0
        %215 = vmatprep.subr.bf16.mxu0 0
        %216 = vmatpush2.bf16.msra.mxu0 0
        %217 = vmatprep.mubr.bf16.mxu0 0
        %218 = vmatmul.mubr.bf16.gmra.mxu0 %v183
        %v219 = vpop.f32.mrf.mxu0
        %v220 = vadd.f32 0.0, %v219
        %v221 = vpop.f32.mrf.mxu0
        %v222 = vpop.f32.mrf.mxu0
        %v223 = vpop.f32.mrf.mxu0
        %224 = vdwg.mxu0
        %v225 = vpack.c.bf16 %v220, %v220
        %227 = vrot.lane.b32.xlu0 %v225, 96
        %v228 = vpop.permute.xlu0 %227
        %vm229 = vcmask 31744
        %v231 = vsel %vm229, %v225, 0
        %v234 = vsel %vm229, %v228, 0
        %236 = vmatprep.subr.bf16.mxu0 0
        %237 = vmatpush1.bf16.xpose.msra.mxu0 0
        %238 = vmatprep.subr.bf16.mxu0 0
        %239 = vmatpush1.bf16.xpose.msra.mxu0 0
        %240 = vmatprep.subr.bf16.mxu0 0
        %241 = vmatpush1.bf16.xpose.msra.mxu0 0
        %242 = vmatprep.subr.bf16.mxu0 0
        %243 = vmatpush1.bf16.xpose.msra.mxu0 0
        %244 = vmatprep.subr.bf16.mxu0 0
        %245 = vmatpush1.bf16.xpose.msra.mxu0 0
        %246 = vmatprep.subr.bf16.mxu0 0
        %247 = vmatpush1.bf16.xpose.msra.mxu0 0
        %248 = vmatprep.subr.bf16.mxu0 0
        %249 = vmatpush1.bf16.xpose.msra.mxu0 0
        %250 = vmatprep.subr.bf16.mxu0 0
        %251 = vmatpush1.bf16.xpose.msra.mxu0 %v234
        %252 = vmatprep.subr.bf16.mxu0 0
        %253 = vmatpush2.bf16.xpose.msra.mxu0 0
        %254 = vmatprep.subr.bf16.mxu0 0
        %255 = vmatpush2.bf16.xpose.msra.mxu0 0
        %256 = vmatprep.subr.bf16.mxu0 0
        %257 = vmatpush2.bf16.xpose.msra.mxu0 0
        %258 = vmatprep.subr.bf16.mxu0 0
        %259 = vmatpush2.bf16.xpose.msra.mxu0 0
        %260 = vmatprep.subr.bf16.mxu0 0
        %261 = vmatpush2.bf16.xpose.msra.mxu0 0
        %262 = vmatprep.subr.bf16.mxu0 0
        %263 = vmatpush2.bf16.xpose.msra.mxu0 0
        %264 = vmatprep.subr.bf16.mxu0 0
        %265 = vmatpush2.bf16.xpose.msra.mxu0 0
        %266 = vmatprep.subr.bf16.mxu0 0
        %267 = vmatpush2.bf16.xpose.msra.mxu0 0
        %268 = vmatprep.mubr.bf16.mxu0 0
        %269 = vmatmul.mubr.bf16.gmra.mxu0 %v231
        %v270 = vpop.f32.mrf.mxu0
        %v271 = vadd.f32 0.0, %v270
        %v272 = vpop.f32.mrf.mxu0
        %v273 = vpop.f32.mrf.mxu0
        %v274 = vpop.f32.mrf.mxu0
        %275 = vdwg.mxu0
        %vm276 = vcmask 64512
        %v277 = vsel %vm276, %v271, -inf
        %278 = vmax.xlane.f32.xlu0 %v277
        %v279 = vpop.xlane.xlu0 %278
        %v280 = vsub.f32 %v271, %v279
        %v281 = vmul.f32 %v280, 1.442695
        %v282 = vpow.pop %v281
        %v283 = vsel %vm276, %v282, 0.0
        %284 = vadd.xlane.f32.xlu0 %v283
        %v285 = vpop.xlane.xlu0 %284
        %v286 = vpack.c.bf16 %v282, %v282
        %287 = vrot.lane.b32.xlu0 %v225, 64
        %v288 = vpop.permute.xlu0 %287
        %v290 = vsel %vm276, %v286, 0
        %vm292 = vcmask 1043456
        %v294 = vsel %vm292, %v288, 0
        %296 = vmatprep.subr.bf16.mxu0 0
        %297 = vmatpush1.bf16.msra.mxu0 0
        %298 = vmatprep.subr.bf16.mxu0 0
        %299 = vmatpush1.bf16.msra.mxu0 0
        %300 = vmatprep.subr.bf16.mxu0 0
        %301 = vmatpush1.bf16.msra.mxu0 0
        %302 = vmatprep.subr.bf16.mxu0 0
        %303 = vmatpush1.bf16.msra.mxu0 0
        %304 = vmatprep.subr.bf16.mxu0 0
        %305 = vmatpush1.bf16.msra.mxu0 0
        %306 = vmatprep.subr.bf16.mxu0 0
        %307 = vmatpush1.bf16.msra.mxu0 0
        %308 = vmatprep.subr.bf16.mxu0 0
        %309 = vmatpush1.bf16.msra.mxu0 0
        %310 = vmatprep.subr.bf16.mxu0 0
        %311 = vmatpush1.bf16.msra.mxu0 %v294
        %312 = vmatprep.subr.bf16.mxu0 0
        %313 = vmatpush2.bf16.msra.mxu0 0
        %314 = vmatprep.subr.bf16.mxu0 0
        %315 = vmatpush2.bf16.msra.mxu0 0
        %316 = vmatprep.subr.bf16.mxu0 0
        %317 = vmatpush2.bf16.msra.mxu0 0
        %318 = vmatprep.subr.bf16.mxu0 0
        %319 = vmatpush2.bf16.msra.mxu0 0
        %320 = vmatprep.subr.bf16.mxu0 0
        %321 = vmatpush2.bf16.msra.mxu0 0
        %322 = vmatprep.subr.bf16.mxu0 0
        %323 = vmatpush2.bf16.msra.mxu0 0
        %324 = vmatprep.subr.bf16.mxu0 0
        %325 = vmatpush2.bf16.msra.mxu0 0
        %326 = vmatprep.subr.bf16.mxu0 0
        %327 = vmatpush2.bf16.msra.mxu0 0
        %328 = vmatprep.mubr.bf16.mxu0 0
        %329 = vmatmul.mubr.bf16.gmra.mxu0 %v290
        %v330 = vpop.f32.mrf.mxu0
        %v331 = vadd.f32 0.0, %v330
        %v332 = vpop.f32.mrf.mxu0
        %v333 = vpop.f32.mrf.mxu0
        %v334 = vpop.f32.mrf.mxu0
        %335 = vdwg.mxu0
        %v336 = vrcp.pop %v285
        %v337 = vmul.f32 %v331, %v336
        %338 = vrot.lane.b32.xlu0 %v225, 124
        %v339 = vpop.permute.xlu0 %338
        %340 = vrot.lane.b32.xlu0 %v225, 92
        %v341 = vpop.permute.xlu0 %340
        %v343 = vsel %vm229, %v339, 0
        %v346 = vsel %vm229, %v341, 0
        %348 = vmatprep.subr.bf16.mxu0 0
        %349 = vmatpush1.bf16.xpose.msra.mxu0 0
        %350 = vmatprep.subr.bf16.mxu0 0
        %351 = vmatpush1.bf16.xpose.msra.mxu0 0
        %352 = vmatprep.subr.bf16.mxu0 0
        %353 = vmatpush1.bf16.xpose.msra.mxu0 0
        %354 = vmatprep.subr.bf16.mxu0 0
        %355 = vmatpush1.bf16.xpose.msra.mxu0 0
        %356 = vmatprep.subr.bf16.mxu0 0
        %357 = vmatpush1.bf16.xpose.msra.mxu0 0
        %358 = vmatprep.subr.bf16.mxu0 0
        %359 = vmatpush1.bf16.xpose.msra.mxu0 0
        %360 = vmatprep.subr.bf16.mxu0 0
        %361 = vmatpush1.bf16.xpose.msra.mxu0 0
        %362 = vmatprep.subr.bf16.mxu0 0
        %363 = vmatpush1.bf16.xpose.msra.mxu0 %v346
        %364 = vmatprep.subr.bf16.mxu0 0
        %365 = vmatpush2.bf16.xpose.msra.mxu0 0
        %366 = vmatprep.subr.bf16.mxu0 0
        %367 = vmatpush2.bf16.xpose.msra.mxu0 0
        %368 = vmatprep.subr.bf16.mxu0 0
        %369 = vmatpush2.bf16.xpose.msra.mxu0 0
        %370 = vmatprep.subr.bf16.mxu0 0
        %371 = vmatpush2.bf16.xpose.msra.mxu0 0
        %372 = vmatprep.subr.bf16.mxu0 0
        %373 = vmatpush2.bf16.xpose.msra.mxu0 0
        %374 = vmatprep.subr.bf16.mxu0 0
        %375 = vmatpush2.bf16.xpose.msra.mxu0 0
        %376 = vmatprep.subr.bf16.mxu0 0
        %377 = vmatpush2.bf16.xpose.msra.mxu0 0
        %378 = vmatprep.subr.bf16.mxu0 0
        %379 = vmatpush2.bf16.xpose.msra.mxu0 0
        %380 = vmatprep.mubr.bf16.mxu0 0
        %381 = vmatmul.mubr.bf16.gmra.mxu0 %v343
        %v382 = vpop.f32.mrf.mxu0
        %v383 = vadd.f32 0.0, %v382
        %v384 = vpop.f32.mrf.mxu0
        %v385 = vpop.f32.mrf.mxu0
        %v386 = vpop.f32.mrf.mxu0
        %387 = vdwg.mxu0
        %v388 = vsel %vm276, %v383, -inf
        %389 = vmax.xlane.f32.xlu0 %v388
        %v390 = vpop.xlane.xlu0 %389
        %v391 = vsub.f32 %v383, %v390
        %v392 = vmul.f32 %v391, 1.442695
        %v393 = vpow.pop %v392
        %v394 = vsel %vm276, %v393, 0.0
        %395 = vadd.xlane.f32.xlu0 %v394
        %v396 = vpop.xlane.xlu0 %395
        %v397 = vpack.c.bf16 %v393, %v393
        %398 = vrot.lane.b32.xlu0 %v225, 60
        %v399 = vpop.permute.xlu0 %398
        %v401 = vsel %vm276, %v397, 0
        %v404 = vsel %vm292, %v399, 0
        %406 = vmatprep.subr.bf16.mxu0 0
        %407 = vmatpush1.bf16.msra.mxu0 0
        %408 = vmatprep.subr.bf16.mxu0 0
        %409 = vmatpush1.bf16.msra.mxu0 0
        %410 = vmatprep.subr.bf16.mxu0 0
        %411 = vmatpush1.bf16.msra.mxu0 0
        %412 = vmatprep.subr.bf16.mxu0 0
        %413 = vmatpush1.bf16.msra.mxu0 0
        %414 = vmatprep.subr.bf16.mxu0 0
        %415 = vmatpush1.bf16.msra.mxu0 0
        %416 = vmatprep.subr.bf16.mxu0 0
        %417 = vmatpush1.bf16.msra.mxu0 0
        %418 = vmatprep.subr.bf16.mxu0 0
        %419 = vmatpush1.bf16.msra.mxu0 0
        %420 = vmatprep.subr.bf16.mxu0 0
        %421 = vmatpush1.bf16.msra.mxu0 %v404
        %422 = vmatprep.subr.bf16.mxu0 0
        %423 = vmatpush2.bf16.msra.mxu0 0
        %424 = vmatprep.subr.bf16.mxu0 0
        %425 = vmatpush2.bf16.msra.mxu0 0
        %426 = vmatprep.subr.bf16.mxu0 0
        %427 = vmatpush2.bf16.msra.mxu0 0
        %428 = vmatprep.subr.bf16.mxu0 0
        %429 = vmatpush2.bf16.msra.mxu0 0
        %430 = vmatprep.subr.bf16.mxu0 0
        %431 = vmatpush2.bf16.msra.mxu0 0
        %432 = vmatprep.subr.bf16.mxu0 0
        %433 = vmatpush2.bf16.msra.mxu0 0
        %434 = vmatprep.subr.bf16.mxu0 0
        %435 = vmatpush2.bf16.msra.mxu0 0
        %436 = vmatprep.subr.bf16.mxu0 0
        %437 = vmatpush2.bf16.msra.mxu0 0
        %438 = vmatprep.mubr.bf16.mxu0 0
        %439 = vmatmul.mubr.bf16.gmra.mxu0 %v401
        %v440 = vpop.f32.mrf.mxu0
        %v441 = vadd.f32 0.0, %v440
        %v442 = vpop.f32.mrf.mxu0
        %v443 = vpop.f32.mrf.mxu0
        %v444 = vpop.f32.mrf.mxu0
        %445 = vdwg.mxu0
        %v446 = vrcp.pop %v396
        %v447 = vmul.f32 %v441, %v446
        %448 = vrot.lane.b32.xlu0 %v225, 120
        %v449 = vpop.permute.xlu0 %448
        %450 = vrot.lane.b32.xlu0 %v225, 88
        %v451 = vpop.permute.xlu0 %450
        %v453 = vsel %vm229, %v449, 0
        %v456 = vsel %vm229, %v451, 0
        %458 = vmatprep.subr.bf16.mxu0 0
        %459 = vmatpush1.bf16.xpose.msra.mxu0 0
        %460 = vmatprep.subr.bf16.mxu0 0
        %461 = vmatpush1.bf16.xpose.msra.mxu0 0
        %462 = vmatprep.subr.bf16.mxu0 0
        %463 = vmatpush1.bf16.xpose.msra.mxu0 0
        %464 = vmatprep.subr.bf16.mxu0 0
        %465 = vmatpush1.bf16.xpose.msra.mxu0 0
        %466 = vmatprep.subr.bf16.mxu0 0
        %467 = vmatpush1.bf16.xpose.msra.mxu0 0
        %468 = vmatprep.subr.bf16.mxu0 0
        %469 = vmatpush1.bf16.xpose.msra.mxu0 0
        %470 = vmatprep.subr.bf16.mxu0 0
        %471 = vmatpush1.bf16.xpose.msra.mxu0 0
        %472 = vmatprep.subr.bf16.mxu0 0
        %473 = vmatpush1.bf16.xpose.msra.mxu0 %v456
        %474 = vmatprep.subr.bf16.mxu0 0
        %475 = vmatpush2.bf16.xpose.msra.mxu0 0
        %476 = vmatprep.subr.bf16.mxu0 0
        %477 = vmatpush2.bf16.xpose.msra.mxu0 0
        %478 = vmatprep.subr.bf16.mxu0 0
        %479 = vmatpush2.bf16.xpose.msra.mxu0 0
        %480 = vmatprep.subr.bf16.mxu0 0
        %481 = vmatpush2.bf16.xpose.msra.mxu0 0
        %482 = vmatprep.subr.bf16.mxu0 0
        %483 = vmatpush2.bf16.xpose.msra.mxu0 0
        %484 = vmatprep.subr.bf16.mxu0 0
        %485 = vmatpush2.bf16.xpose.msra.mxu0 0
        %486 = vmatprep.subr.bf16.mxu0 0
        %487 = vmatpush2.bf16.xpose.msra.mxu0 0
        %488 = vmatprep.subr.bf16.mxu0 0
        %489 = vmatpush2.bf16.xpose.msra.mxu0 0
        %490 = vmatprep.mubr.bf16.mxu0 0
        %491 = vmatmul.mubr.bf16.gmra.mxu0 %v453
        %v492 = vpop.f32.mrf.mxu0
        %v493 = vadd.f32 0.0, %v492
        %v494 = vpop.f32.mrf.mxu0
        %v495 = vpop.f32.mrf.mxu0
        %v496 = vpop.f32.mrf.mxu0
        %497 = vdwg.mxu0
        %v498 = vsel %vm276, %v493, -inf
        %499 = vmax.xlane.f32.xlu0 %v498
        %v500 = vpop.xlane.xlu0 %499
        %v501 = vsub.f32 %v493, %v500
        %v502 = vmul.f32 %v501, 1.442695
        %v503 = vpow.pop %v502
        %v504 = vsel %vm276, %v503, 0.0
        %505 = vadd.xlane.f32.xlu0 %v504
        %v506 = vpop.xlane.xlu0 %505
        %v507 = vpack.c.bf16 %v503, %v503
        %508 = vrot.lane.b32.xlu0 %v225, 56
        %v509 = vpop.permute.xlu0 %508
        %v511 = vsel %vm276, %v507, 0
        %v514 = vsel %vm292, %v509, 0
        %516 = vmatprep.subr.bf16.mxu0 0
        %517 = vmatpush1.bf16.msra.mxu0 0
        %518 = vmatprep.subr.bf16.mxu0 0
        %519 = vmatpush1.bf16.msra.mxu0 0
        %520 = vmatprep.subr.bf16.mxu0 0
        %521 = vmatpush1.bf16.msra.mxu0 0
        %522 = vmatprep.subr.bf16.mxu0 0
        %523 = vmatpush1.bf16.msra.mxu0 0
        %524 = vmatprep.subr.bf16.mxu0 0
        %525 = vmatpush1.bf16.msra.mxu0 0
        %526 = vmatprep.subr.bf16.mxu0 0
        %527 = vmatpush1.bf16.msra.mxu0 0
        %528 = vmatprep.subr.bf16.mxu0 0
        %529 = vmatpush1.bf16.msra.mxu0 0
        %530 = vmatprep.subr.bf16.mxu0 0
        %531 = vmatpush1.bf16.msra.mxu0 %v514
        %532 = vmatprep.subr.bf16.mxu0 0
        %533 = vmatpush2.bf16.msra.mxu0 0
        %534 = vmatprep.subr.bf16.mxu0 0
        %535 = vmatpush2.bf16.msra.mxu0 0
        %536 = vmatprep.subr.bf16.mxu0 0
        %537 = vmatpush2.bf16.msra.mxu0 0
        %538 = vmatprep.subr.bf16.mxu0 0
        %539 = vmatpush2.bf16.msra.mxu0 0
        %540 = vmatprep.subr.bf16.mxu0 0
        %541 = vmatpush2.bf16.msra.mxu0 0
        %542 = vmatprep.subr.bf16.mxu0 0
        %543 = vmatpush2.bf16.msra.mxu0 0
        %544 = vmatprep.subr.bf16.mxu0 0
        %545 = vmatpush2.bf16.msra.mxu0 0
        %546 = vmatprep.subr.bf16.mxu0 0
        %547 = vmatpush2.bf16.msra.mxu0 0
        %548 = vmatprep.mubr.bf16.mxu0 0
        %549 = vmatmul.mubr.bf16.gmra.mxu0 %v511
        %v550 = vpop.f32.mrf.mxu0
        %v551 = vadd.f32 0.0, %v550
        %v552 = vpop.f32.mrf.mxu0
        %v553 = vpop.f32.mrf.mxu0
        %v554 = vpop.f32.mrf.mxu0
        %555 = vdwg.mxu0
        %v556 = vrcp.pop %v506
        %v557 = vmul.f32 %v551, %v556
        %558 = vrot.lane.b32.xlu0 %v225, 116
        %v559 = vpop.permute.xlu0 %558
        %560 = vrot.lane.b32.xlu0 %v225, 84
        %v561 = vpop.permute.xlu0 %560
        %v563 = vsel %vm229, %v559, 0
        %v566 = vsel %vm229, %v561, 0
        %568 = vmatprep.subr.bf16.mxu0 0
        %569 = vmatpush1.bf16.xpose.msra.mxu0 0
        %570 = vmatprep.subr.bf16.mxu0 0
        %571 = vmatpush1.bf16.xpose.msra.mxu0 0
        %572 = vmatprep.subr.bf16.mxu0 0
        %573 = vmatpush1.bf16.xpose.msra.mxu0 0
        %574 = vmatprep.subr.bf16.mxu0 0
        %575 = vmatpush1.bf16.xpose.msra.mxu0 0
        %576 = vmatprep.subr.bf16.mxu0 0
        %577 = vmatpush1.bf16.xpose.msra.mxu0 0
        %578 = vmatprep.subr.bf16.mxu0 0
        %579 = vmatpush1.bf16.xpose.msra.mxu0 0
        %580 = vmatprep.subr.bf16.mxu0 0
        %581 = vmatpush1.bf16.xpose.msra.mxu0 0
        %582 = vmatprep.subr.bf16.mxu0 0
        %583 = vmatpush1.bf16.xpose.msra.mxu0 %v566
        %584 = vmatprep.subr.bf16.mxu0 0
        %585 = vmatpush2.bf16.xpose.msra.mxu0 0
        %586 = vmatprep.subr.bf16.mxu0 0
        %587 = vmatpush2.bf16.xpose.msra.mxu0 0
        %588 = vmatprep.subr.bf16.mxu0 0
        %589 = vmatpush2.bf16.xpose.msra.mxu0 0
        %590 = vmatprep.subr.bf16.mxu0 0
        %591 = vmatpush2.bf16.xpose.msra.mxu0 0
        %592 = vmatprep.subr.bf16.mxu0 0
        %593 = vmatpush2.bf16.xpose.msra.mxu0 0
        %594 = vmatprep.subr.bf16.mxu0 0
        %595 = vmatpush2.bf16.xpose.msra.mxu0 0
        %596 = vmatprep.subr.bf16.mxu0 0
        %597 = vmatpush2.bf16.xpose.msra.mxu0 0
        %598 = vmatprep.subr.bf16.mxu0 0
        %599 = vmatpush2.bf16.xpose.msra.mxu0 0
        %600 = vmatprep.mubr.bf16.mxu0 0
        %601 = vmatmul.mubr.bf16.gmra.mxu0 %v563
        %v602 = vpop.f32.mrf.mxu0
        %v603 = vadd.f32 0.0, %v602
        %v604 = vpop.f32.mrf.mxu0
        %v605 = vpop.f32.mrf.mxu0
        %v606 = vpop.f32.mrf.mxu0
        %607 = vdwg.mxu0
        %v608 = vsel %vm276, %v603, -inf
        %609 = vmax.xlane.f32.xlu0 %v608
        %v610 = vpop.xlane.xlu0 %609
        %v611 = vsub.f32 %v603, %v610
        %v612 = vmul.f32 %v611, 1.442695
        %v613 = vpow.pop %v612
        %v614 = vsel %vm276, %v613, 0.0
        %615 = vadd.xlane.f32.xlu0 %v614
        %v616 = vpop.xlane.xlu0 %615
        %v617 = vpack.c.bf16 %v613, %v613
        %618 = vrot.lane.b32.xlu0 %v225, 52
        %v619 = vpop.permute.xlu0 %618
        %v621 = vsel %vm276, %v617, 0
        %v624 = vsel %vm292, %v619, 0
        %626 = vmatprep.subr.bf16.mxu0 0
        %627 = vmatpush1.bf16.msra.mxu0 0
        %628 = vmatprep.subr.bf16.mxu0 0
        %629 = vmatpush1.bf16.msra.mxu0 0
        %630 = vmatprep.subr.bf16.mxu0 0
        %631 = vmatpush1.bf16.msra.mxu0 0
        %632 = vmatprep.subr.bf16.mxu0 0
        %633 = vmatpush1.bf16.msra.mxu0 0
        %634 = vmatprep.subr.bf16.mxu0 0
        %635 = vmatpush1.bf16.msra.mxu0 0
        %636 = vmatprep.subr.bf16.mxu0 0
        %637 = vmatpush1.bf16.msra.mxu0 0
        %638 = vmatprep.subr.bf16.mxu0 0
        %639 = vmatpush1.bf16.msra.mxu0 0
        %640 = vmatprep.subr.bf16.mxu0 0
        %641 = vmatpush1.bf16.msra.mxu0 %v624
        %642 = vmatprep.subr.bf16.mxu0 0
        %643 = vmatpush2.bf16.msra.mxu0 0
        %644 = vmatprep.subr.bf16.mxu0 0
        %645 = vmatpush2.bf16.msra.mxu0 0
        %646 = vmatprep.subr.bf16.mxu0 0
        %647 = vmatpush2.bf16.msra.mxu0 0
        %648 = vmatprep.subr.bf16.mxu0 0
        %649 = vmatpush2.bf16.msra.mxu0 0
        %650 = vmatprep.subr.bf16.mxu0 0
        %651 = vmatpush2.bf16.msra.mxu0 0
        %652 = vmatprep.subr.bf16.mxu0 0
        %653 = vmatpush2.bf16.msra.mxu0 0
        %654 = vmatprep.subr.bf16.mxu0 0
        %655 = vmatpush2.bf16.msra.mxu0 0
        %656 = vmatprep.subr.bf16.mxu0 0
        %657 = vmatpush2.bf16.msra.mxu0 0
        %658 = vmatprep.mubr.bf16.mxu0 0
        %659 = vmatmul.mubr.bf16.gmra.mxu0 %v621
        %v660 = vpop.f32.mrf.mxu0
        %v661 = vadd.f32 0.0, %v660
        %v662 = vpop.f32.mrf.mxu0
        %v663 = vpop.f32.mrf.mxu0
        %v664 = vpop.f32.mrf.mxu0
        %665 = vdwg.mxu0
        %v666 = vrcp.pop %v616
        %v667 = vmul.f32 %v661, %v666
        %668 = vrot.lane.b32.xlu0 %v225, 112
        %v669 = vpop.permute.xlu0 %668
        %670 = vrot.lane.b32.xlu0 %v225, 80
        %v671 = vpop.permute.xlu0 %670
        %v673 = vsel %vm229, %v669, 0
        %v676 = vsel %vm229, %v671, 0
        %678 = vmatprep.subr.bf16.mxu0 0
        %679 = vmatpush1.bf16.xpose.msra.mxu0 0
        %680 = vmatprep.subr.bf16.mxu0 0
        %681 = vmatpush1.bf16.xpose.msra.mxu0 0
        %682 = vmatprep.subr.bf16.mxu0 0
        %683 = vmatpush1.bf16.xpose.msra.mxu0 0
        %684 = vmatprep.subr.bf16.mxu0 0
        %685 = vmatpush1.bf16.xpose.msra.mxu0 0
        %686 = vmatprep.subr.bf16.mxu0 0
        %687 = vmatpush1.bf16.xpose.msra.mxu0 0
        %688 = vmatprep.subr.bf16.mxu0 0
        %689 = vmatpush1.bf16.xpose.msra.mxu0 0
        %690 = vmatprep.subr.bf16.mxu0 0
        %691 = vmatpush1.bf16.xpose.msra.mxu0 0
        %692 = vmatprep.subr.bf16.mxu0 0
        %693 = vmatpush1.bf16.xpose.msra.mxu0 %v676
        %694 = vmatprep.subr.bf16.mxu0 0
        %695 = vmatpush2.bf16.xpose.msra.mxu0 0
        %696 = vmatprep.subr.bf16.mxu0 0
        %697 = vmatpush2.bf16.xpose.msra.mxu0 0
        %698 = vmatprep.subr.bf16.mxu0 0
        %699 = vmatpush2.bf16.xpose.msra.mxu0 0
        %700 = vmatprep.subr.bf16.mxu0 0
        %701 = vmatpush2.bf16.xpose.msra.mxu0 0
        %702 = vmatprep.subr.bf16.mxu0 0
        %703 = vmatpush2.bf16.xpose.msra.mxu0 0
        %704 = vmatprep.subr.bf16.mxu0 0
        %705 = vmatpush2.bf16.xpose.msra.mxu0 0
        %706 = vmatprep.subr.bf16.mxu0 0
        %707 = vmatpush2.bf16.xpose.msra.mxu0 0
        %708 = vmatprep.subr.bf16.mxu0 0
        %709 = vmatpush2.bf16.xpose.msra.mxu0 0
        %710 = vmatprep.mubr.bf16.mxu0 0
        %711 = vmatmul.mubr.bf16.gmra.mxu0 %v673
        %v712 = vpop.f32.mrf.mxu0
        %v713 = vadd.f32 0.0, %v712
        %v714 = vpop.f32.mrf.mxu0
        %v715 = vpop.f32.mrf.mxu0
        %v716 = vpop.f32.mrf.mxu0
        %717 = vdwg.mxu0
        %v718 = vsel %vm276, %v713, -inf
        %719 = vmax.xlane.f32.xlu0 %v718
        %v720 = vpop.xlane.xlu0 %719
        %v721 = vsub.f32 %v713, %v720
        %v722 = vmul.f32 %v721, 1.442695
        %v723 = vpow.pop %v722
        %v724 = vsel %vm276, %v723, 0.0
        %725 = vadd.xlane.f32.xlu0 %v724
        %v726 = vpop.xlane.xlu0 %725
        %v727 = vpack.c.bf16 %v723, %v723
        %728 = vrot.lane.b32.xlu0 %v225, 48
        %v729 = vpop.permute.xlu0 %728
        %v731 = vsel %vm276, %v727, 0
        %v734 = vsel %vm292, %v729, 0
        %736 = vmatprep.subr.bf16.mxu0 0
        %737 = vmatpush1.bf16.msra.mxu0 0
        %738 = vmatprep.subr.bf16.mxu0 0
        %739 = vmatpush1.bf16.msra.mxu0 0
        %740 = vmatprep.subr.bf16.mxu0 0
        %741 = vmatpush1.bf16.msra.mxu0 0
        %742 = vmatprep.subr.bf16.mxu0 0
        %743 = vmatpush1.bf16.msra.mxu0 0
        %744 = vmatprep.subr.bf16.mxu0 0
        %745 = vmatpush1.bf16.msra.mxu0 0
        %746 = vmatprep.subr.bf16.mxu0 0
        %747 = vmatpush1.bf16.msra.mxu0 0
        %748 = vmatprep.subr.bf16.mxu0 0
        %749 = vmatpush1.bf16.msra.mxu0 0
        %750 = vmatprep.subr.bf16.mxu0 0
        %751 = vmatpush1.bf16.msra.mxu0 %v734
        %752 = vmatprep.subr.bf16.mxu0 0
        %753 = vmatpush2.bf16.msra.mxu0 0
        %754 = vmatprep.subr.bf16.mxu0 0
        %755 = vmatpush2.bf16.msra.mxu0 0
        %756 = vmatprep.subr.bf16.mxu0 0
        %757 = vmatpush2.bf16.msra.mxu0 0
        %758 = vmatprep.subr.bf16.mxu0 0
        %759 = vmatpush2.bf16.msra.mxu0 0
        %760 = vmatprep.subr.bf16.mxu0 0
        %761 = vmatpush2.bf16.msra.mxu0 0
        %762 = vmatprep.subr.bf16.mxu0 0
        %763 = vmatpush2.bf16.msra.mxu0 0
        %764 = vmatprep.subr.bf16.mxu0 0
        %765 = vmatpush2.bf16.msra.mxu0 0
        %766 = vmatprep.subr.bf16.mxu0 0
        %767 = vmatpush2.bf16.msra.mxu0 0
        %768 = vmatprep.mubr.bf16.mxu0 0
        %769 = vmatmul.mubr.bf16.gmra.mxu0 %v731
        %v770 = vpop.f32.mrf.mxu0
        %v771 = vadd.f32 0.0, %v770
        %v772 = vpop.f32.mrf.mxu0
        %v773 = vpop.f32.mrf.mxu0
        %v774 = vpop.f32.mrf.mxu0
        %775 = vdwg.mxu0
        %v776 = vrcp.pop %v726
        %v777 = vmul.f32 %v771, %v776
        %778 = vrot.lane.b32.xlu0 %v225, 108
        %v779 = vpop.permute.xlu0 %778
        %780 = vrot.lane.b32.xlu0 %v225, 76
        %v781 = vpop.permute.xlu0 %780
        %v783 = vsel %vm229, %v779, 0
        %v786 = vsel %vm229, %v781, 0
        %788 = vmatprep.subr.bf16.mxu0 0
        %789 = vmatpush1.bf16.xpose.msra.mxu0 0
        %790 = vmatprep.subr.bf16.mxu0 0
        %791 = vmatpush1.bf16.xpose.msra.mxu0 0
        %792 = vmatprep.subr.bf16.mxu0 0
        %793 = vmatpush1.bf16.xpose.msra.mxu0 0
        %794 = vmatprep.subr.bf16.mxu0 0
        %795 = vmatpush1.bf16.xpose.msra.mxu0 0
        %796 = vmatprep.subr.bf16.mxu0 0
        %797 = vmatpush1.bf16.xpose.msra.mxu0 0
        %798 = vmatprep.subr.bf16.mxu0 0
        %799 = vmatpush1.bf16.xpose.msra.mxu0 0
        %800 = vmatprep.subr.bf16.mxu0 0
        %801 = vmatpush1.bf16.xpose.msra.mxu0 0
        %802 = vmatprep.subr.bf16.mxu0 0
        %803 = vmatpush1.bf16.xpose.msra.mxu0 %v786
        %804 = vmatprep.subr.bf16.mxu0 0
        %805 = vmatpush2.bf16.xpose.msra.mxu0 0
        %806 = vmatprep.subr.bf16.mxu0 0
        %807 = vmatpush2.bf16.xpose.msra.mxu0 0
        %808 = vmatprep.subr.bf16.mxu0 0
        %809 = vmatpush2.bf16.xpose.msra.mxu0 0
        %810 = vmatprep.subr.bf16.mxu0 0
        %811 = vmatpush2.bf16.xpose.msra.mxu0 0
        %812 = vmatprep.subr.bf16.mxu0 0
        %813 = vmatpush2.bf16.xpose.msra.mxu0 0
        %814 = vmatprep.subr.bf16.mxu0 0
        %815 = vmatpush2.bf16.xpose.msra.mxu0 0
        %816 = vmatprep.subr.bf16.mxu0 0
        %817 = vmatpush2.bf16.xpose.msra.mxu0 0
        %818 = vmatprep.subr.bf16.mxu0 0
        %819 = vmatpush2.bf16.xpose.msra.mxu0 0
        %820 = vmatprep.mubr.bf16.mxu0 0
        %821 = vmatmul.mubr.bf16.gmra.mxu0 %v783
        %v822 = vpop.f32.mrf.mxu0
        %v823 = vadd.f32 0.0, %v822
        %v824 = vpop.f32.mrf.mxu0
        %v825 = vpop.f32.mrf.mxu0
        %v826 = vpop.f32.mrf.mxu0
        %827 = vdwg.mxu0
        %v828 = vsel %vm276, %v823, -inf
        %829 = vmax.xlane.f32.xlu0 %v828
        %v830 = vpop.xlane.xlu0 %829
        %v831 = vsub.f32 %v823, %v830
        %v832 = vmul.f32 %v831, 1.442695
        %v833 = vpow.pop %v832
        %v834 = vsel %vm276, %v833, 0.0
        %835 = vadd.xlane.f32.xlu0 %v834
        %v836 = vpop.xlane.xlu0 %835
        %v837 = vpack.c.bf16 %v833, %v833
        %838 = vrot.lane.b32.xlu0 %v225, 44
        %v839 = vpop.permute.xlu0 %838
        %v841 = vsel %vm276, %v837, 0
        %v844 = vsel %vm292, %v839, 0
        %846 = vmatprep.subr.bf16.mxu0 0
        %847 = vmatpush1.bf16.msra.mxu0 0
        %848 = vmatprep.subr.bf16.mxu0 0
        %849 = vmatpush1.bf16.msra.mxu0 0
        %850 = vmatprep.subr.bf16.mxu0 0
        %851 = vmatpush1.bf16.msra.mxu0 0
        %852 = vmatprep.subr.bf16.mxu0 0
        %853 = vmatpush1.bf16.msra.mxu0 0
        %854 = vmatprep.subr.bf16.mxu0 0
        %855 = vmatpush1.bf16.msra.mxu0 0
        %856 = vmatprep.subr.bf16.mxu0 0
        %857 = vmatpush1.bf16.msra.mxu0 0
        %858 = vmatprep.subr.bf16.mxu0 0
        %859 = vmatpush1.bf16.msra.mxu0 0
        %860 = vmatprep.subr.bf16.mxu0 0
        %861 = vmatpush1.bf16.msra.mxu0 %v844
        %862 = vmatprep.subr.bf16.mxu0 0
        %863 = vmatpush2.bf16.msra.mxu0 0
        %864 = vmatprep.subr.bf16.mxu0 0
        %865 = vmatpush2.bf16.msra.mxu0 0
        %866 = vmatprep.subr.bf16.mxu0 0
        %867 = vmatpush2.bf16.msra.mxu0 0
        %868 = vmatprep.subr.bf16.mxu0 0
        %869 = vmatpush2.bf16.msra.mxu0 0
        %870 = vmatprep.subr.bf16.mxu0 0
        %871 = vmatpush2.bf16.msra.mxu0 0
        %872 = vmatprep.subr.bf16.mxu0 0
        %873 = vmatpush2.bf16.msra.mxu0 0
        %874 = vmatprep.subr.bf16.mxu0 0
        %875 = vmatpush2.bf16.msra.mxu0 0
        %876 = vmatprep.subr.bf16.mxu0 0
        %877 = vmatpush2.bf16.msra.mxu0 0
        %878 = vmatprep.mubr.bf16.mxu0 0
        %879 = vmatmul.mubr.bf16.gmra.mxu0 %v841
        %v880 = vpop.f32.mrf.mxu0
        %v881 = vadd.f32 0.0, %v880
        %v882 = vpop.f32.mrf.mxu0
        %v883 = vpop.f32.mrf.mxu0
        %v884 = vpop.f32.mrf.mxu0
        %885 = vdwg.mxu0
        %v886 = vrcp.pop %v836
        %v887 = vmul.f32 %v881, %v886
        %888 = vrot.lane.b32.xlu0 %v225, 104
        %v889 = vpop.permute.xlu0 %888
        %890 = vrot.lane.b32.xlu0 %v225, 72
        %v891 = vpop.permute.xlu0 %890
        %v893 = vsel %vm229, %v889, 0
        %v896 = vsel %vm229, %v891, 0
        %898 = vmatprep.subr.bf16.mxu0 0
        %899 = vmatpush1.bf16.xpose.msra.mxu0 0
        %900 = vmatprep.subr.bf16.mxu0 0
        %901 = vmatpush1.bf16.xpose.msra.mxu0 0
        %902 = vmatprep.subr.bf16.mxu0 0
        %903 = vmatpush1.bf16.xpose.msra.mxu0 0
        %904 = vmatprep.subr.bf16.mxu0 0
        %905 = vmatpush1.bf16.xpose.msra.mxu0 0
        %906 = vmatprep.subr.bf16.mxu0 0
        %907 = vmatpush1.bf16.xpose.msra.mxu0 0
        %908 = vmatprep.subr.bf16.mxu0 0
        %909 = vmatpush1.bf16.xpose.msra.mxu0 0
        %910 = vmatprep.subr.bf16.mxu0 0
        %911 = vmatpush1.bf16.xpose.msra.mxu0 0
        %912 = vmatprep.subr.bf16.mxu0 0
        %913 = vmatpush1.bf16.xpose.msra.mxu0 %v896
        %914 = vmatprep.subr.bf16.mxu0 0
        %915 = vmatpush2.bf16.xpose.msra.mxu0 0
        %916 = vmatprep.subr.bf16.mxu0 0
        %917 = vmatpush2.bf16.xpose.msra.mxu0 0
        %918 = vmatprep.subr.bf16.mxu0 0
        %919 = vmatpush2.bf16.xpose.msra.mxu0 0
        %920 = vmatprep.subr.bf16.mxu0 0
        %921 = vmatpush2.bf16.xpose.msra.mxu0 0
        %922 = vmatprep.subr.bf16.mxu0 0
        %923 = vmatpush2.bf16.xpose.msra.mxu0 0
        %924 = vmatprep.subr.bf16.mxu0 0
        %925 = vmatpush2.bf16.xpose.msra.mxu0 0
        %926 = vmatprep.subr.bf16.mxu0 0
        %927 = vmatpush2.bf16.xpose.msra.mxu0 0
        %928 = vmatprep.subr.bf16.mxu0 0
        %929 = vmatpush2.bf16.xpose.msra.mxu0 0
        %930 = vmatprep.mubr.bf16.mxu0 0
        %931 = vmatmul.mubr.bf16.gmra.mxu0 %v893
        %v932 = vpop.f32.mrf.mxu0
        %v933 = vadd.f32 0.0, %v932
        %v934 = vpop.f32.mrf.mxu0
        %v935 = vpop.f32.mrf.mxu0
        %v936 = vpop.f32.mrf.mxu0
        %937 = vdwg.mxu0
        %v938 = vsel %vm276, %v933, -inf
        %939 = vmax.xlane.f32.xlu0 %v938
        %v940 = vpop.xlane.xlu0 %939
        %v941 = vsub.f32 %v933, %v940
        %v942 = vmul.f32 %v941, 1.442695
        %v943 = vpow.pop %v942
        %v944 = vsel %vm276, %v943, 0.0
        %945 = vadd.xlane.f32.xlu0 %v944
        %v946 = vpop.xlane.xlu0 %945
        %v947 = vpack.c.bf16 %v943, %v943
        %948 = vrot.lane.b32.xlu0 %v225, 40
        %v949 = vpop.permute.xlu0 %948
        %v951 = vsel %vm276, %v947, 0
        %v954 = vsel %vm292, %v949, 0
        %956 = vmatprep.subr.bf16.mxu0 0
        %957 = vmatpush1.bf16.msra.mxu0 0
        %958 = vmatprep.subr.bf16.mxu0 0
        %959 = vmatpush1.bf16.msra.mxu0 0
        %960 = vmatprep.subr.bf16.mxu0 0
        %961 = vmatpush1.bf16.msra.mxu0 0
        %962 = vmatprep.subr.bf16.mxu0 0
        %963 = vmatpush1.bf16.msra.mxu0 0
        %964 = vmatprep.subr.bf16.mxu0 0
        %965 = vmatpush1.bf16.msra.mxu0 0
        %966 = vmatprep.subr.bf16.mxu0 0
        %967 = vmatpush1.bf16.msra.mxu0 0
        %968 = vmatprep.subr.bf16.mxu0 0
        %969 = vmatpush1.bf16.msra.mxu0 0
        %970 = vmatprep.subr.bf16.mxu0 0
        %971 = vmatpush1.bf16.msra.mxu0 %v954
        %972 = vmatprep.subr.bf16.mxu0 0
        %973 = vmatpush2.bf16.msra.mxu0 0
        %974 = vmatprep.subr.bf16.mxu0 0
        %975 = vmatpush2.bf16.msra.mxu0 0
        %976 = vmatprep.subr.bf16.mxu0 0
        %977 = vmatpush2.bf16.msra.mxu0 0
        %978 = vmatprep.subr.bf16.mxu0 0
        %979 = vmatpush2.bf16.msra.mxu0 0
        %980 = vmatprep.subr.bf16.mxu0 0
        %981 = vmatpush2.bf16.msra.mxu0 0
        %982 = vmatprep.subr.bf16.mxu0 0
        %983 = vmatpush2.bf16.msra.mxu0 0
        %984 = vmatprep.subr.bf16.mxu0 0
        %985 = vmatpush2.bf16.msra.mxu0 0
        %986 = vmatprep.subr.bf16.mxu0 0
        %987 = vmatpush2.bf16.msra.mxu0 0
        %988 = vmatprep.mubr.bf16.mxu0 0
        %989 = vmatmul.mubr.bf16.gmra.mxu0 %v951
        %v990 = vpop.f32.mrf.mxu0
        %v991 = vadd.f32 0.0, %v990
        %v992 = vpop.f32.mrf.mxu0
        %v993 = vpop.f32.mrf.mxu0
        %v994 = vpop.f32.mrf.mxu0
        %995 = vdwg.mxu0
        %v996 = vrcp.pop %v946
        %v997 = vmul.f32 %v991, %v996
        %998 = vrot.lane.b32.xlu0 %v225, 100
        %v999 = vpop.permute.xlu0 %998
        %1000 = vrot.lane.b32.xlu0 %v225, 68
        %v1001 = vpop.permute.xlu0 %1000
        %v1003 = vsel %vm229, %v999, 0
        %v1006 = vsel %vm229, %v1001, 0
        %1008 = vmatprep.subr.bf16.mxu0 0
        %1009 = vmatpush1.bf16.xpose.msra.mxu0 0
        %1010 = vmatprep.subr.bf16.mxu0 0
        %1011 = vmatpush1.bf16.xpose.msra.mxu0 0
        %1012 = vmatprep.subr.bf16.mxu0 0
        %1013 = vmatpush1.bf16.xpose.msra.mxu0 0
        %1014 = vmatprep.subr.bf16.mxu0 0
        %1015 = vmatpush1.bf16.xpose.msra.mxu0 0
        %1016 = vmatprep.subr.bf16.mxu0 0
        %1017 = vmatpush1.bf16.xpose.msra.mxu0 0
        %1018 = vmatprep.subr.bf16.mxu0 0
        %1019 = vmatpush1.bf16.xpose.msra.mxu0 0
        %1020 = vmatprep.subr.bf16.mxu0 0
        %1021 = vmatpush1.bf16.xpose.msra.mxu0 0
        %1022 = vmatprep.subr.bf16.mxu0 0
        %1023 = vmatpush1.bf16.xpose.msra.mxu0 %v1006
        %1024 = vmatprep.subr.bf16.mxu0 0
        %1025 = vmatpush2.bf16.xpose.msra.mxu0 0
        %1026 = vmatprep.subr.bf16.mxu0 0
        %1027 = vmatpush2.bf16.xpose.msra.mxu0 0
        %1028 = vmatprep.subr.bf16.mxu0 0
        %1029 = vmatpush2.bf16.xpose.msra.mxu0 0
        %1030 = vmatprep.subr.bf16.mxu0 0
        %1031 = vmatpush2.bf16.xpose.msra.mxu0 0
        %1032 = vmatprep.subr.bf16.mxu0 0
        %1033 = vmatpush2.bf16.xpose.msra.mxu0 0
        %1034 = vmatprep.subr.bf16.mxu0 0
        %1035 = vmatpush2.bf16.xpose.msra.mxu0 0
        %1036 = vmatprep.subr.bf16.mxu0 0
        %1037 = vmatpush2.bf16.xpose.msra.mxu0 0
        %1038 = vmatprep.subr.bf16.mxu0 0
        %1039 = vmatpush2.bf16.xpose.msra.mxu0 0
        %1040 = vmatprep.mubr.bf16.mxu0 0
        %1041 = vmatmul.mubr.bf16.gmra.mxu0 %v1003
        %v1042 = vpop.f32.mrf.mxu0
        %v1043 = vadd.f32 0.0, %v1042
        %v1044 = vpop.f32.mrf.mxu0
        %v1045 = vpop.f32.mrf.mxu0
        %v1046 = vpop.f32.mrf.mxu0
        %1047 = vdwg.mxu0
        %v1048 = vsel %vm276, %v1043, -inf
        %1049 = vmax.xlane.f32.xlu0 %v1048
        %v1050 = vpop.xlane.xlu0 %1049
        %v1051 = vsub.f32 %v1043, %v1050
        %v1052 = vmul.f32 %v1051, 1.442695
        %v1053 = vpow.pop %v1052
        %v1054 = vsel %vm276, %v1053, 0.0
        %1055 = vadd.xlane.f32.xlu0 %v1054
        %v1056 = vpop.xlane.xlu0 %1055
        %v1057 = vpack.c.bf16 %v1053, %v1053
        %1058 = vrot.lane.b32.xlu0 %v225, 36
        %v1059 = vpop.permute.xlu0 %1058
        %v1061 = vsel %vm276, %v1057, 0
        %v1064 = vsel %vm292, %v1059, 0
        %1066 = vmatprep.subr.bf16.mxu0 0
        %1067 = vmatpush1.bf16.msra.mxu0 0
        %1068 = vmatprep.subr.bf16.mxu0 0
        %1069 = vmatpush1.bf16.msra.mxu0 0
        %1070 = vmatprep.subr.bf16.mxu0 0
        %1071 = vmatpush1.bf16.msra.mxu0 0
        %1072 = vmatprep.subr.bf16.mxu0 0
        %1073 = vmatpush1.bf16.msra.mxu0 0
        %1074 = vmatprep.subr.bf16.mxu0 0
        %1075 = vmatpush1.bf16.msra.mxu0 0
        %1076 = vmatprep.subr.bf16.mxu0 0
        %1077 = vmatpush1.bf16.msra.mxu0 0
        %1078 = vmatprep.subr.bf16.mxu0 0
        %1079 = vmatpush1.bf16.msra.mxu0 0
        %1080 = vmatprep.subr.bf16.mxu0 0
        %1081 = vmatpush1.bf16.msra.mxu0 %v1064
        %1082 = vmatprep.subr.bf16.mxu0 0
        %1083 = vmatpush2.bf16.msra.mxu0 0
        %1084 = vmatprep.subr.bf16.mxu0 0
        %1085 = vmatpush2.bf16.msra.mxu0 0
        %1086 = vmatprep.subr.bf16.mxu0 0
        %1087 = vmatpush2.bf16.msra.mxu0 0
        %1088 = vmatprep.subr.bf16.mxu0 0
        %1089 = vmatpush2.bf16.msra.mxu0 0
        %1090 = vmatprep.subr.bf16.mxu0 0
        %1091 = vmatpush2.bf16.msra.mxu0 0
        %1092 = vmatprep.subr.bf16.mxu0 0
        %1093 = vmatpush2.bf16.msra.mxu0 0
        %1094 = vmatprep.subr.bf16.mxu0 0
        %1095 = vmatpush2.bf16.msra.mxu0 0
        %1096 = vmatprep.subr.bf16.mxu0 0
        %1097 = vmatpush2.bf16.msra.mxu0 0
        %1098 = vmatprep.mubr.bf16.mxu0 0
        %1099 = vmatmul.mubr.bf16.gmra.mxu0 %v1061
        %v1100 = vpop.f32.mrf.mxu0
        %v1101 = vadd.f32 0.0, %v1100
        %v1102 = vpop.f32.mrf.mxu0
        %v1103 = vpop.f32.mrf.mxu0
        %v1104 = vpop.f32.mrf.mxu0
        %1105 = vdwg.mxu0
        %v1106 = vrcp.pop %v1056
        %v1107 = vmul.f32 %v1101, %v1106
        %1109 = vrot.lane.b32.xlu0 %v447, 4
        %v1110 = vpop.permute.xlu0 %1109
        %1113 = vrot.lane.b32.xlu0 %v557, 8
        %v1114 = vpop.permute.xlu0 %1113
        %1117 = vrot.lane.b32.xlu0 %v667, 12
        %v1118 = vpop.permute.xlu0 %1117
        %1121 = vrot.lane.b32.xlu0 %v777, 16
        %v1122 = vpop.permute.xlu0 %1121
        %1125 = vrot.lane.b32.xlu0 %v887, 20
        %v1126 = vpop.permute.xlu0 %1125
        %1129 = vrot.lane.b32.xlu0 %v997, 24
        %v1130 = vpop.permute.xlu0 %1129
        %1133 = vrot.lane.b32.xlu0 %v1107, 28
        %v1134 = vpop.permute.xlu0 %1133
        %v1136 = vsel %vm229, %v337, %v1110
        %v1137 = vsel %vm276, %v1136, %v1114
        %vm1138 = vcmask 97280
        %v1139 = vsel %vm1138, %v1137, %v1118
        %vm1140 = vcmask 130048
        %v1141 = vsel %vm1140, %v1139, %v1122
        %vm1142 = vcmask 162816
        %v1143 = vsel %vm1142, %v1141, %v1126
        %vm1144 = vcmask 195584
        %v1145 = vsel %vm1144, %v1143, %v1130
        %vm1146 = vcmask 228352
        %v1147 = vsel %vm1146, %v1145, %v1134
        %1148 = vst.msk [vmem:[%s157] sm:$0xff] %vm181, %v1147
        %s1149 = sand.u32 %s94, 1
        %s1150 = scalar_lea.sflag [#allocation3], %s1149
        %s1151 = sand.u32 %s94, 1
        %s1152 = smul.addr %s1151, 8
        %s1153 = scalar_lea.vmem [#allocation2], %s1152
        // Predicated region
        $region29: #{multi_head_self_attention.1} parent=27 // pred_check
          %p1154 = pneg %p104
        $region30: #{multi_head_self_attention.1} parent=27 // pred_check_branch
          %1156 = sbr.rel (%p1154) target = $region32
        $region31: #{multi_head_self_attention.1} parent=27 // pred_region
          %s1157 = sadd.s32 %s22, %s23
          %s1159 = ssub.s32 128, 128
          %1160 = vsyncadd %s1150, %s1159
          %s1161 = sadd.s32 %s1157, %s21
          %s1162 = smul.addr %s1161, 128
          %s1163 = scalar_lea.hbm %s2, %s1162
          %s1165 = sshll.u32 %s1153, 4
          %s1166 = int_to_ptr.vmem [resolvable:$true] %s1165
          %1168 = dma.vmem_to_hbm [thread:$0]  %s1166, 128, %s1163, %s1150
        $region32: #{multi_head_self_attention.1} parent=27 // pred_fallthru
          _
      $region28: #{multi_head_self_attention.1} parent=5 // pred_fallthru
        _
      %p1169 = scmp.le.s32.totalorder 2, %s11
      // Predicated region
      $region33: #{multi_head_self_attention.1} parent=5 // pred_check
        %p1170 = pneg %p1169
      $region34: #{multi_head_self_attention.1} parent=5 // pred_check_branch
        %1172 = sbr.rel (%p1170) target = $region36
      $region35: #{multi_head_self_attention.1} parent=5 // pred_region
        %s1173 = ssub.s32 %s11, 2
        // Predicated region
        $region37: #{multi_head_self_attention.1} parent=35 // pred_check
          %p1174 = pneg %p110
        $region38: #{multi_head_self_attention.1} parent=35 // pred_check_branch
          %1176 = sbr.rel (%p1174) target = $region40
        $region39: #{multi_head_self_attention.1} parent=35 // pred_region
          %s1177 = sand.u32 %s95, 1
          %s1178 = scalar_lea.sflag [#allocation3], %s1177
          %s1179 = sand.u32 %s95, 1
          %s1180 = smul.addr %s1179, 8
          %s1181 = scalar_lea.vmem [#allocation2], %s1180
          %1182 = dma.done %s1178, 128
        $region40: #{multi_head_self_attention.1} parent=35 // pred_fallthru
          _
      $region36: #{multi_head_self_attention.1} parent=5 // pred_fallthru
        _
    $region6: #{multi_head_self_attention.1} parent=1 // loop_footer
      %s15 = sadd.s32 1, %s11
    $region7: #{multi_head_self_attention.1} parent=1 // loop_footer_branch
      %10 = sbr.rel target = $region3
    $region8: #{multi_head_self_attention.1} parent=1 // loop_exit
      _
    %1183 = vsyncpa [#allocation3], 1
    %s1184 = scalar_lea.sflag [#allocation3], 1
    %1185 = vsyncpa %s1184, 1

</llo_original>
